<compile_context>
chip_gen: v5e
topology: v5e:2x2
jax: 0.10.0
libtpu: 0.0.40
codegen_flags: <defaults>
</compile_context>

<pallas_src>
import functools

import jax
import jax.numpy as jnp
from jax.experimental import pallas as pl
from jax.experimental.pallas import tpu as pltpu


# ----------------------------------------------------------------------------
# Fused sampler rollout kernel.
#   grid = (N // TILE_N, forecast_steps)   (N tiles parallel, t sequential)
#   The hidden state h lives in a (TILE_N, ctx) VMEM scratch across the t axis.
#   t == 0 also runs the conditioning-stack 1x1 conv (+ReLU) to initialize h.
#   Per step: packed h-side [z|r] matmul, candidate matmul, GRU update, head.
# ----------------------------------------------------------------------------
def _rollout_kernel(xh_ref, wc_ref, bc_ref, xzrc_ref, wzr_ref, wch_ref,
                    wo_ref, bo_ref, o_ref, h_scr, *, ctx):
    # Initialize the hidden state for this N tile at the first forecast step.
    @pl.when(pl.program_id(1) == 0)
    def _():
        cond = jnp.dot(xh_ref[...], wc_ref[...],
                       preferred_element_type=jnp.float32)
        h_scr[...] = jnp.maximum(cond + bc_ref[...], 0.0)

    h = h_scr[...]                                        # f32 gate math
    # packed [z|r] h-side projection: one lane-dense (ctx -> 2*ctx) matmul
    zr = jnp.dot(h.astype(jnp.bfloat16), wzr_ref[...],
                 preferred_element_type=jnp.float32)
    xz = xzrc_ref[...].astype(jnp.float32)                # bf16 -> f32 on load
    z = jax.nn.sigmoid(zr[:, :ctx] + xz[:, :ctx])
    r = jax.nn.sigmoid(zr[:, ctx:] + xz[:, ctx:2 * ctx])
    c = jnp.tanh(
        jnp.dot((r * h).astype(jnp.bfloat16), wch_ref[...],
                preferred_element_type=jnp.float32)
        + xz[:, 2 * ctx:])
    h_new = (1.0 - z) * h + z * c
    h_scr[...] = h_new

    # output head (lane-padded to a multiple of 128; padded lanes are zero)
    y = jnp.dot(h_new.astype(jnp.bfloat16), wo_ref[...],
                preferred_element_type=jnp.float32) + bo_ref[...]
    o_ref[...] = y.astype(o_ref.dtype)                    # bf16 store (half bytes)


def _pick_tile_n(n, target=2048):
    """Largest multiple-of-8 divisor of n that is <= target."""
    t = min(n, target)
    t -= t % 8
    while t > 8 and n % t:
        t -= 8
    return max(t, 8)


def sampler_rollout(xh, xzrc, params, *, forecast_steps, tile_n=None):
    n, kin = xh.shape
    ctx = params["w_cond"].shape[1]
    cp = params["w_out"].shape[1]
    if tile_n is None:
        tile_n = _pick_tile_n(n)
    assert n % tile_n == 0 and tile_n % 8 == 0, (n, tile_n)
    n_tiles = n // tile_n

    kernel = functools.partial(_rollout_kernel, ctx=ctx)
    return pl.pallas_call(
        kernel,
        out_shape=jax.ShapeDtypeStruct((forecast_steps, n, cp), jnp.bfloat16),
        grid=(n_tiles, forecast_steps),
        in_specs=[
            pl.BlockSpec((tile_n, kin), lambda i, t: (i, 0)),     # s2d context tile
            pl.BlockSpec((kin, ctx), lambda i, t: (0, 0)),        # w_cond
            pl.BlockSpec((1, ctx), lambda i, t: (0, 0)),          # b_cond
            pl.BlockSpec((tile_n, 3 * ctx), lambda i, t: (i, 0)), # hoisted x-proj tile
            pl.BlockSpec((ctx, 2 * ctx), lambda i, t: (0, 0)),    # packed [wzh|wrh]
            pl.BlockSpec((ctx, ctx), lambda i, t: (0, 0)),        # wch
            pl.BlockSpec((ctx, cp), lambda i, t: (0, 0)),         # head weight (padded)
            pl.BlockSpec((1, cp), lambda i, t: (0, 0)),           # head bias (padded)
        ],
        out_specs=pl.BlockSpec((None, tile_n, cp), lambda i, t: (t, i, 0)),
        scratch_shapes=[pltpu.VMEM((tile_n, ctx), jnp.float32)],  # hidden h per tile
        compiler_params=pltpu.CompilerParams(
            # N tiles are independent -> parallel (megacore); rollout sequential.
            dimension_semantics=("parallel", "arbitrary"),
            # Raise the default scoped VMEM limit (32 MiB v6e/v7x, 16 MiB v5e)
            # so realistic TILE_N choices are not rejected; per-tile footprint
            # at the defaults is still far below v7x's 64 MiB physical VMEM.
            vmem_limit_bytes=64 * 1024 * 1024),
    )(
        xh, params["w_cond"], params["b_cond"], xzrc,
        params["wzr_h"], params["wch_h"], params["w_out"], params["b_out"],
    )


# ----------------------------------------------------------------------------
# Parameter construction (deterministic, synthetic).
# ----------------------------------------------------------------------------
def init_params(key, *, input_channels, output_shape, t_in,
                context_channels, latent_channels):
    assert context_channels % 128 == 0, "lane-dense context width required"
    assert latent_channels % 128 == 0, "lane-dense latent width required"
    s = 8
    h_lat = max(output_shape // 32, 1)
    keys = jax.random.split(key, 12)
    scale = 0.05

    def w(k, shape, dtype=jnp.bfloat16):
        return (scale * jax.random.normal(k, shape, dtype=jnp.float32)
                ).astype(dtype)

    cin_cond = t_in * s * s * input_channels
    cout_head = s * s * input_channels
    cout_pad = ((cout_head + 127) // 128) * 128

    # NOTE: padded head columns / bias lanes MUST stay zero -- the post-kernel
    # slice y_all[:, :, :cout] relies on it.
    w_out = scale * jax.random.normal(
        keys[9], (context_channels, cout_head), dtype=jnp.float32)
    w_out = jnp.pad(
        w_out, ((0, 0), (0, cout_pad - cout_head))).astype(jnp.bfloat16)

    params = {
        "w_cond": w(keys[0], (cin_cond, context_channels)),
        "b_cond": jnp.zeros((1, context_channels), jnp.float32),
        # latent stack runs in plain JAX (tiny), keep f32
        "w_lat": w(keys[1], (8 * input_channels, latent_channels), jnp.float32),
        "b_lat": jnp.zeros((1, latent_channels), jnp.float32),
        "z_latent": jax.random.normal(
            keys[2], (1, 8 * input_channels, h_lat, h_lat), dtype=jnp.float32),
        # h-side gate weights packed [z | r] for one lane-dense matmul.
        "wzr_h": jnp.concatenate(
            [w(keys[3], (context_channels, context_channels)),
             w(keys[5], (context_channels, context_channels))], axis=1),
        "wch_h": w(keys[7], (context_channels, context_channels)),
        # x-side (latent) gate weights packed [z | r | c]; loop-invariant.
        "wx_packed": w(keys[4], (latent_channels, 3 * context_channels),
                       jnp.float32),
        "b_gates": jnp.zeros((1, 3 * context_channels), jnp.float32),
        "w_out": w_out,
        "b_out": jnp.zeros((1, cout_pad), jnp.float32),
    }
    return params


# ----------------------------------------------------------------------------
# Generator forward (the DGMR.forward path).
# ----------------------------------------------------------------------------
def dgmr_forward(x, params, *, forecast_steps, tile_n=None):
    # x: (B, T, C, H, W) float32, NCHW per frame (PyTorch convention).
    B, T, C, H, W = x.shape
    s = 8
    Hs, Ws = H // s, W // s
    N = B * Hs * Ws
    ctx = params["w_cond"].shape[1]
    cout = s * s * C

    # conditioning stack input: space-to-depth(8) over all context frames,
    # built directly in bf16 (no separate f32->bf16 pass over (N, kin)).
    xh = jnp.transpose(x.astype(jnp.bfloat16), (0, 1, 3, 4, 2))  # B,T,H,W,C
    xh = xh.reshape(B, T, Hs, s, Ws, s, C)
    xh = jnp.transpose(xh, (0, 1, 2, 4, 3, 5, 6))                # B,T,Hs,Ws,s,s,C
    xh = xh.reshape(B, T, Hs, Ws, s * s * C)
    xh = jnp.transpose(xh, (0, 2, 3, 1, 4)).reshape(N, T * s * s * C)

    # Latent stack + hoisted x-side gate projection: a handful of rows, done
    # once in plain JAX (folding it into a pallas_call would be pure launch
    # overhead).  Broadcast to (N, 3*ctx) in bf16 (half the HBM/VMEM bytes).
    zlat = params["z_latent"]                                    # (1, 8C, Hl, Wl)
    _, Cz, Hl, Wl = zlat.shape
    zl = jnp.transpose(zlat, (0, 2, 3, 1)).reshape(Hl * Wl, Cz)
    lat = jnp.maximum(zl @ params["w_lat"] + params["b_lat"], 0.0)
    xproj = (lat @ params["wx_packed"] + params["b_gates"]).astype(jnp.bfloat16)
    xproj = xproj.reshape(Hl, Wl, 3 * ctx)
    xproj = jnp.repeat(jnp.repeat(xproj, Hs // Hl, axis=0), Ws // Wl, axis=1)
    xzrc = jnp.broadcast_to(
        xproj[None], (B, Hs, Ws, 3 * ctx)).reshape(N, 3 * ctx)

    # fused sampler rollout: conditioning conv (t==0) + ConvGRU + head.
    y_all = sampler_rollout(xh, xzrc, params,
                            forecast_steps=forecast_steps, tile_n=tile_n)

    # depth-to-space(8) once over the whole stacked output (slice of the
    # zero-padded head lanes folds into this single XLA rearrangement).
    y = y_all[:, :, :cout].reshape(forecast_steps, B, Hs, Ws, s, s, C)
    y = jnp.transpose(y, (1, 0, 2, 4, 3, 5, 6))                  # B,F,Hs,s,Ws,s,C
    y = y.reshape(B, forecast_steps, H, W, C).astype(jnp.float32)
    return jnp.transpose(y, (0, 1, 4, 2, 3))                     # B,F,C,H,W


# ----------------------------------------------------------------------------
if __name__ == "__main__":
    # Small, forward-consistent shapes (lane-dense channel widths; K=256 fills
    # the 256-wide v6e/v7x MXU and tiles cleanly on v5e's 128x128 MXU).
    B, T_IN, C_IN = 2, 4, 1
    OUTPUT_SHAPE = 64            # H = W = 64
    FORECAST_STEPS = 4
    CONTEXT_CHANNELS = 256
    LATENT_CHANNELS = 256
    TILE_N = 64                  # small demo tile -> grid=(2, 4) exercises N tiling

    key = jax.random.PRNGKey(0)
    kx, kp = jax.random.split(key)
    x = jax.random.normal(kx, (B, T_IN, C_IN, OUTPUT_SHAPE, OUTPUT_SHAPE),
                          dtype=jnp.float32)
    params = init_params(
        kp,
        input_channels=C_IN,
        output_shape=OUTPUT_SHAPE,
        t_in=T_IN,
        context_channels=CONTEXT_CHANNELS,
        latent_channels=LATENT_CHANNELS,
    )

    fwd = jax.jit(functools.partial(
        dgmr_forward, forecast_steps=FORECAST_STEPS, tile_n=TILE_N))
    out = jax.block_until_ready(fwd(x, params))
    assert out.shape == (B, FORECAST_STEPS, C_IN, OUTPUT_SHAPE, OUTPUT_SHAPE), out.shape
    assert bool(jnp.all(jnp.isfinite(out)))
    print("KERNEL_OK")
</pallas_src>

<mosaic_0001>
module attributes {stable_mosaic.version = 11 : i64} {
  func.func @_rollout_kernel(%arg0: i32, %arg1: i32, %arg2: memref<64x256xbf16, #tpu.memory_space<vmem>>, %arg3: memref<256x256xbf16, #tpu.memory_space<vmem>>, %arg4: memref<1x256xf32, #tpu.memory_space<vmem>>, %arg5: memref<64x768xbf16, #tpu.memory_space<vmem>>, %arg6: memref<256x512xbf16, #tpu.memory_space<vmem>>, %arg7: memref<256x256xbf16, #tpu.memory_space<vmem>>, %arg8: memref<256x128xbf16, #tpu.memory_space<vmem>>, %arg9: memref<1x128xf32, #tpu.memory_space<vmem>>, %arg10: memref<1x64x128xbf16, #tpu.memory_space<vmem>>, %arg11: memref<64x256xf32, #tpu.memory_space<vmem>>) attributes {dimension_semantics = [#tpu.dimension_semantics<parallel>, #tpu.dimension_semantics<arbitrary>], iteration_bounds = array<i64: 2, 4>, scalar_prefetch = 0 : i64, scratch_operands = 1 : i64, tpu.core_type = #tpu.core_type<tc>, window_params = [{transform_indices = @transform_0, window_bounds = array<i64: 64, 256>}, {pipeline_mode = #tpu.pipeline_mode<synchronous>, transform_indices = @transform_1, window_bounds = array<i64: 256, 256>}, {pipeline_mode = #tpu.pipeline_mode<synchronous>, transform_indices = @transform_2, window_bounds = array<i64: 1, 256>}, {transform_indices = @transform_3, window_bounds = array<i64: 64, 768>}, {pipeline_mode = #tpu.pipeline_mode<synchronous>, transform_indices = @transform_4, window_bounds = array<i64: 256, 512>}, {pipeline_mode = #tpu.pipeline_mode<synchronous>, transform_indices = @transform_5, window_bounds = array<i64: 256, 256>}, {pipeline_mode = #tpu.pipeline_mode<synchronous>, transform_indices = @transform_6, window_bounds = array<i64: 256, 128>}, {pipeline_mode = #tpu.pipeline_mode<synchronous>, transform_indices = @transform_7, window_bounds = array<i64: 1, 128>}, {transform_indices = @transform_8, window_bounds = array<i64: 1, 64, 128>}]} {
    %c0_i32 = arith.constant 0 : i32
    %0 = arith.cmpi eq, %arg1, %c0_i32 : i32
    %1 = arith.extui %0 : i1 to i32
    %c0_i32_0 = arith.constant 0 : i32
    %2 = arith.cmpi ne, %1, %c0_i32_0 : i32
    scf.if %2 {
      %c0_22 = arith.constant 0 : index
      %c0_23 = arith.constant 0 : index
      %48 = vector.load %arg2[%c0_22, %c0_23] : memref<64x256xbf16, #tpu.memory_space<vmem>>, vector<64x256xbf16>
      %c0_24 = arith.constant 0 : index
      %c0_25 = arith.constant 0 : index
      %49 = vector.load %arg3[%c0_24, %c0_25] : memref<256x256xbf16, #tpu.memory_space<vmem>>, vector<256x256xbf16>
      %cst_26 = arith.constant dense<0.000000e+00> : vector<64x256xf32>
      %50 = tpu.matmul %48, %49, %cst_26 {dimension_numbers = #tpu.dot_dimension_numbers<[1], [0], [0], [1], [0, 0, 1, 1], [], []>} : vector<64x256xbf16>, vector<256x256xbf16>, vector<64x256xf32> -> vector<64x256xf32>
      %c0_27 = arith.constant 0 : index
      %c0_28 = arith.constant 0 : index
      %51 = vector.load %arg4[%c0_27, %c0_28] : memref<1x256xf32, #tpu.memory_space<vmem>>, vector<1x256xf32>
      %52 = vector.broadcast %51 : vector<1x256xf32> to vector<64x256xf32>
      %53 = arith.addf %50, %52 : vector<64x256xf32>
      %cst_29 = arith.constant 0.000000e+00 : f32
      %54 = vector.broadcast %cst_29 : f32 to vector<64x256xf32>
      %55 = arith.maximumf %53, %54 : vector<64x256xf32>
      %c0_30 = arith.constant 0 : index
      %c0_31 = arith.constant 0 : index
      %56 = vector.load %arg11[%c0_30, %c0_31] : memref<64x256xf32, #tpu.memory_space<vmem>>, vector<64x256xf32>
      tpu.vector_store %arg11[%c0_30, %c0_31], %55 {strides = array<i32>} : memref<64x256xf32, #tpu.memory_space<vmem>>, vector<64x256xf32>,
    } else {
    }
    %c0 = arith.constant 0 : index
    %c0_1 = arith.constant 0 : index
    %3 = vector.load %arg11[%c0, %c0_1] : memref<64x256xf32, #tpu.memory_space<vmem>>, vector<64x256xf32>
    %4 = arith.truncf %3 : vector<64x256xf32> to vector<64x256xbf16>
    %c0_2 = arith.constant 0 : index
    %c0_3 = arith.constant 0 : index
    %5 = vector.load %arg6[%c0_2, %c0_3] : memref<256x512xbf16, #tpu.memory_space<vmem>>, vector<256x512xbf16>
    %cst = arith.constant dense<0.000000e+00> : vector<64x512xf32>
    %6 = tpu.matmul %4, %5, %cst {dimension_numbers = #tpu.dot_dimension_numbers<[1], [0], [0], [1], [0, 0, 1, 1], [], []>} : vector<64x256xbf16>, vector<256x512xbf16>, vector<64x512xf32> -> vector<64x512xf32>
    %c0_4 = arith.constant 0 : index
    %c0_5 = arith.constant 0 : index
    %7 = vector.load %arg5[%c0_4, %c0_5] : memref<64x768xbf16, #tpu.memory_space<vmem>>, vector<64x768xbf16>
    %8 = arith.extf %7 : vector<64x768xbf16> to vector<64x768xf32>
    %9 = vector.extract_strided_slice %6 {offsets = [0, 0], sizes = [64, 256], strides = [1, 1]} : vector<64x512xf32> to vector<64x256xf32>
    %10 = vector.extract_strided_slice %8 {offsets = [0, 0], sizes = [64, 256], strides = [1, 1]} : vector<64x768xf32> to vector<64x256xf32>
    %11 = arith.addf %9, %10 : vector<64x256xf32>
    %12 = arith.negf %11 : vector<64x256xf32>
    %13 = math.exp %12 : vector<64x256xf32>
    %cst_6 = arith.constant 1.000000e+00 : f32
    %14 = vector.broadcast %cst_6 : f32 to vector<64x256xf32>
    %15 = arith.addf %14, %13 : vector<64x256xf32>
    %16 = arith.divf %14, %15 : vector<64x256xf32>
    %17 = vector.extract_strided_slice %6 {offsets = [0, 256], sizes = [64, 256], strides = [1, 1]} : vector<64x512xf32> to vector<64x256xf32>
    %18 = vector.extract_strided_slice %8 {offsets = [0, 256], sizes = [64, 256], strides = [1, 1]} : vector<64x768xf32> to vector<64x256xf32>
    %19 = arith.addf %17, %18 : vector<64x256xf32>
    %20 = arith.negf %19 : vector<64x256xf32>
    %21 = math.exp %20 : vector<64x256xf32>
    %cst_7 = arith.constant 1.000000e+00 : f32
    %22 = vector.broadcast %cst_7 : f32 to vector<64x256xf32>
    %23 = arith.addf %22, %21 : vector<64x256xf32>
    %24 = arith.divf %22, %23 : vector<64x256xf32>
    %25 = arith.mulf %24, %3 : vector<64x256xf32>
    %26 = arith.truncf %25 : vector<64x256xf32> to vector<64x256xbf16>
    %c0_8 = arith.constant 0 : index
    %c0_9 = arith.constant 0 : index
    %27 = vector.load %arg7[%c0_8, %c0_9] : memref<256x256xbf16, #tpu.memory_space<vmem>>, vector<256x256xbf16>
    %cst_10 = arith.constant dense<0.000000e+00> : vector<64x256xf32>
    %28 = tpu.matmul %26, %27, %cst_10 {dimension_numbers = #tpu.dot_dimension_numbers<[1], [0], [0], [1], [0, 0, 1, 1], [], []>} : vector<64x256xbf16>, vector<256x256xbf16>, vector<64x256xf32> -> vector<64x256xf32>
    %29 = vector.extract_strided_slice %8 {offsets = [0, 512], sizes = [64, 256], strides = [1, 1]} : vector<64x768xf32> to vector<64x256xf32>
    %30 = arith.addf %28, %29 : vector<64x256xf32>
    %31 = math.tanh %30 : vector<64x256xf32>
    %cst_11 = arith.constant 1.000000e+00 : f32
    %32 = vector.broadcast %cst_11 : f32 to vector<64x256xf32>
    %33 = arith.subf %32, %16 : vector<64x256xf32>
    %34 = arith.mulf %33, %3 : vector<64x256xf32>
    %35 = arith.mulf %16, %31 : vector<64x256xf32>
    %36 = arith.addf %34, %35 : vector<64x256xf32>
    %c0_12 = arith.constant 0 : index
    %c0_13 = arith.constant 0 : index
    %37 = vector.load %arg11[%c0_12, %c0_13] : memref<64x256xf32, #tpu.memory_space<vmem>>, vector<64x256xf32>
    tpu.vector_store %arg11[%c0_12, %c0_13], %36 {strides = array<i32>} : memref<64x256xf32, #tpu.memory_space<vmem>>, vector<64x256xf32>,
    %38 = arith.truncf %36 : vector<64x256xf32> to vector<64x256xbf16>
    %c0_14 = arith.constant 0 : index
    %c0_15 = arith.constant 0 : index
    %39 = vector.load %arg8[%c0_14, %c0_15] : memref<256x128xbf16, #tpu.memory_space<vmem>>, vector<256x128xbf16>
    %cst_16 = arith.constant dense<0.000000e+00> : vector<64x128xf32>
    %40 = tpu.matmul %38, %39, %cst_16 {dimension_numbers = #tpu.dot_dimension_numbers<[1], [0], [0], [1], [0, 0, 1, 1], [], []>} : vector<64x256xbf16>, vector<256x128xbf16>, vector<64x128xf32> -> vector<64x128xf32>
    %c0_17 = arith.constant 0 : index
    %c0_18 = arith.constant 0 : index
    %41 = vector.load %arg9[%c0_17, %c0_18] : memref<1x128xf32, #tpu.memory_space<vmem>>, vector<1x128xf32>
    %42 = vector.broadcast %41 : vector<1x128xf32> to vector<64x128xf32>
    %43 = arith.addf %40, %42 : vector<64x128xf32>
    %44 = arith.truncf %43 : vector<64x128xf32> to vector<64x128xbf16>
    %c0_19 = arith.constant 0 : index
    %c0_20 = arith.constant 0 : index
    %c0_21 = arith.constant 0 : index
    %45 = vector.load %arg10[%c0_19, %c0_20, %c0_21] : memref<1x64x128xbf16, #tpu.memory_space<vmem>>, vector<1x64x128xbf16>
    %46 = vector.shape_cast %45 : vector<1x64x128xbf16> to vector<64x128xbf16>
    %47 = vector.shape_cast %44 : vector<64x128xbf16> to vector<1x64x128xbf16>
    tpu.vector_store %arg10[%c0_19, %c0_20, %c0_21], %47 {strides = array<i32>} : memref<1x64x128xbf16, #tpu.memory_space<vmem>>, vector<1x64x128xbf16>,
    return
  }
  func.func @transform_0(%arg0: i32, %arg1: i32) -> (i32, i32) {
    %c0_i32 = arith.constant 0 : i32
    %c0_i32_0 = arith.constant 0 : i32
    return %arg0, %c0_i32 : i32, i32
  }
  func.func @transform_1(%arg0: i32, %arg1: i32) -> (i32, i32) {
    %c0_i32 = arith.constant 0 : i32
    %c0_i32_0 = arith.constant 0 : i32
    %c0_i32_1 = arith.constant 0 : i32
    return %c0_i32, %c0_i32_0 : i32, i32
  }
  func.func @transform_2(%arg0: i32, %arg1: i32) -> (i32, i32) {
    %c0_i32 = arith.constant 0 : i32
    %c0_i32_0 = arith.constant 0 : i32
    %c0_i32_1 = arith.constant 0 : i32
    return %c0_i32, %c0_i32_0 : i32, i32
  }
  func.func @transform_3(%arg0: i32, %arg1: i32) -> (i32, i32) {
    %c0_i32 = arith.constant 0 : i32
    %c0_i32_0 = arith.constant 0 : i32
    return %arg0, %c0_i32 : i32, i32
  }
  func.func @transform_4(%arg0: i32, %arg1: i32) -> (i32, i32) {
    %c0_i32 = arith.constant 0 : i32
    %c0_i32_0 = arith.constant 0 : i32
    %c0_i32_1 = arith.constant 0 : i32
    return %c0_i32, %c0_i32_0 : i32, i32
  }
  func.func @transform_5(%arg0: i32, %arg1: i32) -> (i32, i32) {
    %c0_i32 = arith.constant 0 : i32
    %c0_i32_0 = arith.constant 0 : i32
    %c0_i32_1 = arith.constant 0 : i32
    return %c0_i32, %c0_i32_0 : i32, i32
  }
  func.func @transform_6(%arg0: i32, %arg1: i32) -> (i32, i32) {
    %c0_i32 = arith.constant 0 : i32
    %c0_i32_0 = arith.constant 0 : i32
    %c0_i32_1 = arith.constant 0 : i32
    return %c0_i32, %c0_i32_0 : i32, i32
  }
  func.func @transform_7(%arg0: i32, %arg1: i32) -> (i32, i32) {
    %c0_i32 = arith.constant 0 : i32
    %c0_i32_0 = arith.constant 0 : i32
    %c0_i32_1 = arith.constant 0 : i32
    return %c0_i32, %c0_i32_0 : i32, i32
  }
  func.func @transform_8(%arg0: i32, %arg1: i32) -> (i32, i32, i32) {
    %c0_i32 = arith.constant 0 : i32
    %c0_i32_0 = arith.constant 0 : i32
    return %arg1, %arg0, %c0_i32 : i32, i32, i32
  }
}

</mosaic_0001>

<llo_original>
// kernel: dgmr_forward.1
$region0: #{dgmr_forward.1}
  #allocation0 [shape = 'u32[]', space=smem, size = 0x4, offset = 0x4, fixed_abs, tag = 'smem constant byte address 0x4 - core index']
  #allocation1 [shape = 'u32[72,128]{1,0:T(1,128)}', space=vmem, size = 0x9000, scoped, tag = 'internal scratch']
  #allocation2 [shape = 'f32[64,256]{1,0:T(8,128)}', space=vmem, size = 0x10000, scoped, tag = 'scratch operand']
  %s0 = inlined_call_operand.vmem [shape: bf16[128,256], index: 0, kind: input, shape index: {}]
  %s1 = inlined_call_operand.vmem [shape: bf16[256,256], index: 1, kind: input, shape index: {}]
  %s2 = inlined_call_operand.vmem [shape: f32[1,256], index: 2, kind: input, shape index: {}]
  %s3 = inlined_call_operand.vmem [shape: bf16[128,768], index: 3, kind: input, shape index: {}]
  %s4 = inlined_call_operand.vmem [shape: bf16[256,512], index: 4, kind: input, shape index: {}]
  %s5 = inlined_call_operand.vmem [shape: bf16[256,256], index: 5, kind: input, shape index: {}]
  %s6 = inlined_call_operand.vmem [shape: bf16[256,128], index: 6, kind: input, shape index: {}]
  %s7 = inlined_call_operand.vmem [shape: f32[1,128], index: 7, kind: input, shape index: {}]
  %s8 = inlined_call_operand.vmem [shape: bf16[4,128,128], index: 8, kind: output, shape index: {}]
  %s9 = sld [smem:[#allocation0]]
  $region69: #{dgmr_forward.1} parent=0
    _
  %s11 = ssub.s32 1, %s9
  %s12 = scalar_select 0, %s11, %s9
  loop: start=0, step=1, limit=10
  $region2: #{dgmr_forward.1} parent=0 // loop_pre_header
    _
  $region3: #{dgmr_forward.1} parent=0 // loop_header
    %s14 = sphi 0, %s18
    %p15 = scmp.ge.s32.totalorder %s14, 10
    %s21 = sphi 0, %s33
    %s22 = sphi 0, %s29
    %s23 = sphi 0, %s21
    %s24 = sphi 0, %s22
    %s25 = sphi 0, %s23
    %s26 = sphi 0, %s24
    %s36 = sphi 0, %s38
    %s39 = sphi 0, %s36
    %s40 = sphi 0, %s39
    %s56 = sphi 0, %s40
    %s60 = sphi 0, %s60
    %s62 = sphi 0, %s60
    %s63 = sphi 0, %s62
    %s77 = sphi 0, %s63
    %s81 = sphi 0, %s81
    %s83 = sphi 0, %s81
    %s84 = sphi 0, %s83
    %s98 = sphi 0, %s84
    %s104 = sphi 0, %s106
    %s107 = sphi 0, %s104
    %s108 = sphi 0, %s107
    %s124 = sphi 0, %s108
    %s128 = sphi 0, %s128
    %s130 = sphi 0, %s128
    %s131 = sphi 0, %s130
    %s145 = sphi 0, %s131
    %s149 = sphi 0, %s149
    %s151 = sphi 0, %s149
    %s152 = sphi 0, %s151
    %s166 = sphi 0, %s152
    %s170 = sphi 0, %s170
    %s172 = sphi 0, %s170
    %s173 = sphi 0, %s172
    %s187 = sphi 0, %s173
    %s191 = sphi 0, %s191
    %s193 = sphi 0, %s191
    %s194 = sphi 0, %s193
    %s208 = sphi 0, %s194
    %s216 = sphi 0, %s218
    %s219 = sphi 0, %s216
    %s220 = sphi 0, %s219
    %s236 = sphi 0, %s220
  $region4: #{dgmr_forward.1} parent=0 // loop_header_branch
    %17 = sbr.rel (%p15) target = $region8
  $region5: #{dgmr_forward.1} parent=0 // loop_body
    %s19 = ssub.s32 %s14, 1
    %s20 = ssub.s32 %s14, 2
    %s27 = sadd.s32 1, %s22
    %p28 = scmp.ge.s32.totalorder %s27, 4
    %s29 = scalar_select %p28, 0, %s27
    %s30 = sadd.s32 1, %s21
    %s31 = scalar_select %p28, %s30, %s21
    %p32 = scmp.ge.s32.totalorder %s31, 2
    %s33 = scalar_select %p32, 0, %s31
    %s34 = ssub.s32 %s21, %s33
    %p35 = scmp.eq.s32.totalorder %s34, 0
    %s37 = sadd.s32 %s36, 1
    %s38 = scalar_select %p35, %s36, %s37
    %p41 = pneg %p35
    %p42 = scmp.eq.s32.totalorder %s14, 7
    %p43 = por %p41, %p42
    %p44 = scmp.ne.s32.totalorder %s36, %s39
    %p45 = scmp.eq.s32.totalorder %s14, 0
    %p46 = por %p44, %p45
    %p47 = scmp.ne.s32.totalorder %s36, %s39
    %p48 = scmp.eq.s32.totalorder %s19, 7
    %p49 = por %p47, %p48
    %p50 = scmp.ne.s32.totalorder %s39, %s40
    %p51 = scmp.eq.s32.totalorder %s19, 0
    %p52 = por %p50, %p51
    %p53 = scmp.ne.s32.totalorder %s39, %s40
    %p54 = scmp.eq.s32.totalorder %s20, 7
    %p55 = por %p53, %p54
    %p57 = scmp.ne.s32.totalorder %s40, %s56
    %p58 = scmp.eq.s32.totalorder %s20, 0
    %p59 = por %p57, %p58
    %s61 = sadd.s32 %s60, 1
    %p64 = scmp.eq.s32.totalorder %s14, 7
    %p65 = scmp.ne.s32.totalorder %s60, %s62
    %p66 = scmp.eq.s32.totalorder %s14, 0
    %p67 = por %p65, %p66
    %p68 = scmp.ne.s32.totalorder %s60, %s62
    %p69 = scmp.eq.s32.totalorder %s19, 7
    %p70 = por %p68, %p69
    %p71 = scmp.ne.s32.totalorder %s62, %s63
    %p72 = scmp.eq.s32.totalorder %s19, 0
    %p73 = por %p71, %p72
    %p74 = scmp.ne.s32.totalorder %s62, %s63
    %p75 = scmp.eq.s32.totalorder %s20, 7
    %p76 = por %p74, %p75
    %p78 = scmp.ne.s32.totalorder %s63, %s77
    %p79 = scmp.eq.s32.totalorder %s20, 0
    %p80 = por %p78, %p79
    %s82 = sadd.s32 %s81, 1
    %p85 = scmp.eq.s32.totalorder %s14, 7
    %p86 = scmp.ne.s32.totalorder %s81, %s83
    %p87 = scmp.eq.s32.totalorder %s14, 0
    %p88 = por %p86, %p87
    %p89 = scmp.ne.s32.totalorder %s81, %s83
    %p90 = scmp.eq.s32.totalorder %s19, 7
    %p91 = por %p89, %p90
    %p92 = scmp.ne.s32.totalorder %s83, %s84
    %p93 = scmp.eq.s32.totalorder %s19, 0
    %p94 = por %p92, %p93
    %p95 = scmp.ne.s32.totalorder %s83, %s84
    %p96 = scmp.eq.s32.totalorder %s20, 7
    %p97 = por %p95, %p96
    %p99 = scmp.ne.s32.totalorder %s84, %s98
    %p100 = scmp.eq.s32.totalorder %s20, 0
    %p101 = por %p99, %p100
    %s102 = ssub.s32 %s21, %s33
    %p103 = scmp.eq.s32.totalorder %s102, 0
    %s105 = sadd.s32 %s104, 1
    %s106 = scalar_select %p103, %s104, %s105
    %p109 = pneg %p103
    %p110 = scmp.eq.s32.totalorder %s14, 7
    %p111 = por %p109, %p110
    %p112 = scmp.ne.s32.totalorder %s104, %s107
    %p113 = scmp.eq.s32.totalorder %s14, 0
    %p114 = por %p112, %p113
    %p115 = scmp.ne.s32.totalorder %s104, %s107
    %p116 = scmp.eq.s32.totalorder %s19, 7
    %p117 = por %p115, %p116
    %p118 = scmp.ne.s32.totalorder %s107, %s108
    %p119 = scmp.eq.s32.totalorder %s19, 0
    %p120 = por %p118, %p119
    %p121 = scmp.ne.s32.totalorder %s107, %s108
    %p122 = scmp.eq.s32.totalorder %s20, 7
    %p123 = por %p121, %p122
    %p125 = scmp.ne.s32.totalorder %s108, %s124
    %p126 = scmp.eq.s32.totalorder %s20, 0
    %p127 = por %p125, %p126
    %s129 = sadd.s32 %s128, 1
    %p132 = scmp.eq.s32.totalorder %s14, 7
    %p133 = scmp.ne.s32.totalorder %s128, %s130
    %p134 = scmp.eq.s32.totalorder %s14, 0
    %p135 = por %p133, %p134
    %p136 = scmp.ne.s32.totalorder %s128, %s130
    %p137 = scmp.eq.s32.totalorder %s19, 7
    %p138 = por %p136, %p137
    %p139 = scmp.ne.s32.totalorder %s130, %s131
    %p140 = scmp.eq.s32.totalorder %s19, 0
    %p141 = por %p139, %p140
    %p142 = scmp.ne.s32.totalorder %s130, %s131
    %p143 = scmp.eq.s32.totalorder %s20, 7
    %p144 = por %p142, %p143
    %p146 = scmp.ne.s32.totalorder %s131, %s145
    %p147 = scmp.eq.s32.totalorder %s20, 0
    %p148 = por %p146, %p147
    %s150 = sadd.s32 %s149, 1
    %p153 = scmp.eq.s32.totalorder %s14, 7
    %p154 = scmp.ne.s32.totalorder %s149, %s151
    %p155 = scmp.eq.s32.totalorder %s14, 0
    %p156 = por %p154, %p155
    %p157 = scmp.ne.s32.totalorder %s149, %s151
    %p158 = scmp.eq.s32.totalorder %s19, 7
    %p159 = por %p157, %p158
    %p160 = scmp.ne.s32.totalorder %s151, %s152
    %p161 = scmp.eq.s32.totalorder %s19, 0
    %p162 = por %p160, %p161
    %p163 = scmp.ne.s32.totalorder %s151, %s152
    %p164 = scmp.eq.s32.totalorder %s20, 7
    %p165 = por %p163, %p164
    %p167 = scmp.ne.s32.totalorder %s152, %s166
    %p168 = scmp.eq.s32.totalorder %s20, 0
    %p169 = por %p167, %p168
    %s171 = sadd.s32 %s170, 1
    %p174 = scmp.eq.s32.totalorder %s14, 7
    %p175 = scmp.ne.s32.totalorder %s170, %s172
    %p176 = scmp.eq.s32.totalorder %s14, 0
    %p177 = por %p175, %p176
    %p178 = scmp.ne.s32.totalorder %s170, %s172
    %p179 = scmp.eq.s32.totalorder %s19, 7
    %p180 = por %p178, %p179
    %p181 = scmp.ne.s32.totalorder %s172, %s173
    %p182 = scmp.eq.s32.totalorder %s19, 0
    %p183 = por %p181, %p182
    %p184 = scmp.ne.s32.totalorder %s172, %s173
    %p185 = scmp.eq.s32.totalorder %s20, 7
    %p186 = por %p184, %p185
    %p188 = scmp.ne.s32.totalorder %s173, %s187
    %p189 = scmp.eq.s32.totalorder %s20, 0
    %p190 = por %p188, %p189
    %s192 = sadd.s32 %s191, 1
    %p195 = scmp.eq.s32.totalorder %s14, 7
    %p196 = scmp.ne.s32.totalorder %s191, %s193
    %p197 = scmp.eq.s32.totalorder %s14, 0
    %p198 = por %p196, %p197
    %p199 = scmp.ne.s32.totalorder %s191, %s193
    %p200 = scmp.eq.s32.totalorder %s19, 7
    %p201 = por %p199, %p200
    %p202 = scmp.ne.s32.totalorder %s193, %s194
    %p203 = scmp.eq.s32.totalorder %s19, 0
    %p204 = por %p202, %p203
    %p205 = scmp.ne.s32.totalorder %s193, %s194
    %p206 = scmp.eq.s32.totalorder %s20, 7
    %p207 = por %p205, %p206
    %p209 = scmp.ne.s32.totalorder %s194, %s208
    %p210 = scmp.eq.s32.totalorder %s20, 0
    %p211 = por %p209, %p210
    %s212 = ssub.s32 %s22, %s29
    %s213 = ssub.s32 %s21, %s33
    %s214 = sor.u32 %s212, %s213
    %p215 = scmp.eq.s32.totalorder %s214, 0
    %s217 = sadd.s32 %s216, 1
    %s218 = scalar_select %p215, %s216, %s217
    %p221 = pneg %p215
    %p222 = scmp.eq.s32.totalorder %s14, 7
    %p223 = por %p221, %p222
    %p224 = scmp.ne.s32.totalorder %s216, %s219
    %p225 = scmp.eq.s32.totalorder %s14, 0
    %p226 = por %p224, %p225
    %p227 = scmp.ne.s32.totalorder %s216, %s219
    %p228 = scmp.eq.s32.totalorder %s19, 7
    %p229 = por %p227, %p228
    %p230 = scmp.ne.s32.totalorder %s219, %s220
    %p231 = scmp.eq.s32.totalorder %s19, 0
    %p232 = por %p230, %p231
    %p233 = scmp.ne.s32.totalorder %s219, %s220
    %p234 = scmp.eq.s32.totalorder %s20, 7
    %p235 = por %p233, %p234
    %p237 = scmp.ne.s32.totalorder %s220, %s236
    %p238 = scmp.eq.s32.totalorder %s20, 0
    %p239 = por %p237, %p238
    %p240 = scmp.le.s32.totalorder 1, %s14
    %p241 = scmp.lt.s32.totalorder %s14, 9
    %p242 = pnand %p240, %p241
    %p243 = pneg %p242
    // Predicated region
    $region9: #{dgmr_forward.1} parent=5 // pred_check
      _
    $region10: #{dgmr_forward.1} parent=5 // pred_check_branch
      %245 = sbr.rel (%p242) target = $region12
    $region11: #{dgmr_forward.1} parent=5 // pred_region
      %s246 = ssub.s32 %s14, 1
      // Predicated region
      $region13: #{dgmr_forward.1} parent=11 // pred_check
        %p247 = pneg %p73
      $region14: #{dgmr_forward.1} parent=11 // pred_check_branch
        %249 = sbr.rel (%p247) target = $region16
      $region15: #{dgmr_forward.1} parent=11 // pred_region
        _
      $region16: #{dgmr_forward.1} parent=11 // pred_fallthru
        _
      // Predicated region
      $region17: #{dgmr_forward.1} parent=11 // pred_check
        %p250 = pneg %p94
      $region18: #{dgmr_forward.1} parent=11 // pred_check_branch
        %252 = sbr.rel (%p250) target = $region20
      $region19: #{dgmr_forward.1} parent=11 // pred_region
        _
      $region20: #{dgmr_forward.1} parent=11 // pred_fallthru
        _
      // Predicated region
      $region21: #{dgmr_forward.1} parent=11 // pred_check
        %p253 = pneg %p141
      $region22: #{dgmr_forward.1} parent=11 // pred_check_branch
        %255 = sbr.rel (%p253) target = $region24
      $region23: #{dgmr_forward.1} parent=11 // pred_region
        _
      $region24: #{dgmr_forward.1} parent=11 // pred_fallthru
        _
      // Predicated region
      $region25: #{dgmr_forward.1} parent=11 // pred_check
        %p256 = pneg %p162
      $region26: #{dgmr_forward.1} parent=11 // pred_check_branch
        %258 = sbr.rel (%p256) target = $region28
      $region27: #{dgmr_forward.1} parent=11 // pred_region
        _
      $region28: #{dgmr_forward.1} parent=11 // pred_fallthru
        _
      // Predicated region
      $region29: #{dgmr_forward.1} parent=11 // pred_check
        %p259 = pneg %p183
      $region30: #{dgmr_forward.1} parent=11 // pred_check_branch
        %261 = sbr.rel (%p259) target = $region32
      $region31: #{dgmr_forward.1} parent=11 // pred_region
        _
      $region32: #{dgmr_forward.1} parent=11 // pred_fallthru
        _
      // Predicated region
      $region33: #{dgmr_forward.1} parent=11 // pred_check
        %p262 = pneg %p204
      $region34: #{dgmr_forward.1} parent=11 // pred_check_branch
        %264 = sbr.rel (%p262) target = $region36
      $region35: #{dgmr_forward.1} parent=11 // pred_region
        _
      $region36: #{dgmr_forward.1} parent=11 // pred_fallthru
        _
    $region12: #{dgmr_forward.1} parent=5 // pred_fallthru
      _
    %p265 = scmp.lt.s32.totalorder %s14, 8
    // Predicated region
    $region37: #{dgmr_forward.1} parent=5 // pred_check
      %p266 = pneg %p265
    $region38: #{dgmr_forward.1} parent=5 // pred_check_branch
      %268 = sbr.rel (%p266) target = $region40
    $region39: #{dgmr_forward.1} parent=5 // pred_region
      // Predicated region
      $region41: #{dgmr_forward.1} parent=39 // pred_check
        %p269 = pneg %p46
      $region42: #{dgmr_forward.1} parent=39 // pred_check_branch
        %271 = sbr.rel (%p269) target = $region44
      $region43: #{dgmr_forward.1} parent=39 // pred_region
        %s272 = smul.u32 8, %s21
        %p273 = scmp.lt.s32.totalorder %s272, 15
        %s274 = scalar_select %p273, %s272, 15
        %s275 = smul.addr %s274, 2
        %s276 = smul.addr %s275, 4
        %s277 = scalar_lea.vmem %s0, %s276
        %s278 = smul.u32 8, %s21
      $region44: #{dgmr_forward.1} parent=39 // pred_fallthru
        _
      // Predicated region
      $region45: #{dgmr_forward.1} parent=39 // pred_check
        %p279 = pneg %p114
      $region46: #{dgmr_forward.1} parent=39 // pred_check_branch
        %281 = sbr.rel (%p279) target = $region48
      $region47: #{dgmr_forward.1} parent=39 // pred_region
        %s282 = smul.u32 8, %s21
        %p283 = scmp.lt.s32.totalorder %s282, 15
        %s284 = scalar_select %p283, %s282, 15
        %s285 = smul.addr %s284, 6
        %s286 = smul.addr %s285, 4
        %s287 = scalar_lea.vmem %s3, %s286
        %s288 = smul.u32 8, %s21
      $region48: #{dgmr_forward.1} parent=39 // pred_fallthru
        _
    $region40: #{dgmr_forward.1} parent=5 // pred_fallthru
      _
    %p289 = scmp.le.s32.totalorder 1, %s14
    %p290 = scmp.lt.s32.totalorder %s14, 9
    %p291 = pnand %p289, %p290
    %p292 = pneg %p291
    // Predicated region
    $region49: #{dgmr_forward.1} parent=5 // pred_check
      _
    $region50: #{dgmr_forward.1} parent=5 // pred_check_branch
      %294 = sbr.rel (%p291) target = $region52
    $region51: #{dgmr_forward.1} parent=5 // pred_region
      %s295 = ssub.s32 %s14, 1
      %s296 = smul.u32 8, %s23
      %p297 = scmp.lt.s32.totalorder %s296, 15
      %s298 = scalar_select %p297, %s296, 15
      %s299 = smul.addr %s298, 2
      %s300 = smul.addr %s299, 4
      %s301 = scalar_lea.vmem %s0, %s300
      %p302 = pneg %p52
      %p303 = pneg %p49
      %p304 = pneg %p73
      %p305 = pneg %p70
      %p306 = pneg %p94
      %p307 = pneg %p91
      %s308 = smul.u32 8, %s23
      %p309 = scmp.lt.s32.totalorder %s308, 15
      %s310 = scalar_select %p309, %s308, 15
      %s311 = smul.addr %s310, 6
      %s312 = smul.addr %s311, 4
      %s313 = scalar_lea.vmem %s3, %s312
      %p314 = pneg %p120
      %p315 = pneg %p117
      %p316 = pneg %p141
      %p317 = pneg %p138
      %p318 = pneg %p162
      %p319 = pneg %p159
      %p320 = pneg %p183
      %p321 = pneg %p180
      %p322 = pneg %p204
      %p323 = pneg %p201
      %p324 = pneg %p232
      %p325 = pneg %p229
      %s326 = smul.u32 8, %s23
      %p327 = scmp.lt.s32.totalorder %s24, 3
      %s328 = scalar_select %p327, %s24, 3
      %p329 = scmp.lt.s32.totalorder %s326, 15
      %s330 = scalar_select %p329, %s326, 15
      %s331 = smul.addr %s328, 16
      %s332 = sadd.s32 %s330, %s331
      %s333 = smul.addr %s332, 4
      %s334 = scalar_lea.vmem %s8, %s333
      %s335 = smul.u32 8, %s23
      %p336 = scmp.lt.s32.totalorder %s335, 15
      %s337 = scalar_select %p336, %s335, 15
      %s338 = smul.addr %s337, 2
      %s339 = smul.addr %s338, 4
      %s340 = scalar_lea.vmem %s0, %s339
      %s341 = smul.u32 8, %s23
      %s342 = smul.u32 8, %s23
      %p343 = scmp.lt.s32.totalorder %s342, 15
      %s344 = scalar_select %p343, %s342, 15
      %s345 = smul.addr %s344, 6
      %s346 = smul.addr %s345, 4
      %s347 = scalar_lea.vmem %s3, %s346
      %s348 = smul.u32 8, %s23
      %s349 = smul.u32 8, %s23
      %p350 = scmp.lt.s32.totalorder %s24, 3
      %s351 = scalar_select %p350, %s24, 3
      %p352 = scmp.lt.s32.totalorder %s349, 15
      %s353 = scalar_select %p352, %s349, 15
      %s354 = smul.addr %s351, 16
      %s355 = sadd.s32 %s353, %s354
      %s356 = smul.addr %s355, 4
      %s357 = scalar_lea.vmem %s8, %s356
      %s358 = smul.u32 8, %s23
      %p359 = scmp.eq.s32.totalorder %s24, 0
      // Predicated region
      $region53: #{dgmr_forward.1} parent=51 // pred_check
        %p360 = pneg %p359
      $region54: #{dgmr_forward.1} parent=51 // pred_check_branch
        %362 = sbr.rel (%p360) target = $region56
      $region55: #{dgmr_forward.1} parent=51 // pred_region
        %v363 = vld [vmem:[%s340] sm:$0xff]
        %v364 = vld [vmem:[%s340 + $0x8] sm:$0xff]
        %v365 = vld [vmem:[%s340 + $0x10] sm:$0xff]
        %v366 = vld [vmem:[%s340 + $0x18] sm:$0xff]
        %v367 = vld [vmem:[%s340 + $0x20] sm:$0xff]
        %v368 = vld [vmem:[%s340 + $0x28] sm:$0xff]
        %v369 = vld [vmem:[%s340 + $0x30] sm:$0xff]
        %v370 = vld [vmem:[%s340 + $0x38] sm:$0xff]
        %v371 = vld [vmem:[%s1] sm:$0xff]
        %v372 = vld [vmem:[%s1 + $0x8] sm:$0xff]
        %v373 = vld [vmem:[%s1 + $0x10] sm:$0xff]
        %v374 = vld [vmem:[%s1 + $0x18] sm:$0xff]
        %v375 = vld [vmem:[%s1 + $0x20] sm:$0xff]
        %v376 = vld [vmem:[%s1 + $0x28] sm:$0xff]
        %v377 = vld [vmem:[%s1 + $0x30] sm:$0xff]
        %v378 = vld [vmem:[%s1 + $0x38] sm:$0xff]
        %v379 = vld [vmem:[%s1 + $0x40] sm:$0xff]
        %v380 = vld [vmem:[%s1 + $0x48] sm:$0xff]
        %v381 = vld [vmem:[%s1 + $0x50] sm:$0xff]
        %v382 = vld [vmem:[%s1 + $0x58] sm:$0xff]
        %v383 = vld [vmem:[%s1 + $0x60] sm:$0xff]
        %v384 = vld [vmem:[%s1 + $0x68] sm:$0xff]
        %v385 = vld [vmem:[%s1 + $0x70] sm:$0xff]
        %v386 = vld [vmem:[%s1 + $0x78] sm:$0xff]
        %v387 = vld [vmem:[%s1 + $0x80] sm:$0xff]
        %v388 = vld [vmem:[%s1 + $0x88] sm:$0xff]
        %v389 = vld [vmem:[%s1 + $0x90] sm:$0xff]
        %v390 = vld [vmem:[%s1 + $0x98] sm:$0xff]
        %v391 = vld [vmem:[%s1 + $0xa0] sm:$0xff]
        %v392 = vld [vmem:[%s1 + $0xa8] sm:$0xff]
        %v393 = vld [vmem:[%s1 + $0xb0] sm:$0xff]
        %v394 = vld [vmem:[%s1 + $0xb8] sm:$0xff]
        %v395 = vld [vmem:[%s1 + $0xc0] sm:$0xff]
        %v396 = vld [vmem:[%s1 + $0xc8] sm:$0xff]
        %v397 = vld [vmem:[%s1 + $0xd0] sm:$0xff]
        %v398 = vld [vmem:[%s1 + $0xd8] sm:$0xff]
        %v399 = vld [vmem:[%s1 + $0xe0] sm:$0xff]
        %v400 = vld [vmem:[%s1 + $0xe8] sm:$0xff]
        %v401 = vld [vmem:[%s1 + $0xf0] sm:$0xff]
        %v402 = vld [vmem:[%s1 + $0xf8] sm:$0xff]
        %v403 = vld [vmem:[%s2] sm:$0x3]
        %v405 = vperm.slane %v403, 0
        %v406 = vperm.slane %v403, 1
        %v417 = vunpack.c.l.b16 %v363
        %v418 = vunpack.c.h.b16 %v363
        %v419 = vunpack.c.l.b16 %v364
        %v420 = vunpack.c.h.b16 %v364
        %v421 = vunpack.c.l.b16 %v365
        %v422 = vunpack.c.h.b16 %v365
        %v423 = vunpack.c.l.b16 %v366
        %v424 = vunpack.c.h.b16 %v366
        %v425 = vunpack.c.l.b16 %v367
        %v426 = vunpack.c.h.b16 %v367
        %v427 = vunpack.c.l.b16 %v368
        %v428 = vunpack.c.h.b16 %v368
        %v429 = vunpack.c.l.b16 %v369
        %v430 = vunpack.c.h.b16 %v369
        %v431 = vunpack.c.l.b16 %v370
        %v432 = vunpack.c.h.b16 %v370
        %v433 = vpack.c.b16 %v419, %v417
        %v434 = vpack.c.b16 %v420, %v418
        %v435 = vpack.c.b16 %v423, %v421
        %v436 = vpack.c.b16 %v424, %v422
        %v437 = vpack.c.b16 %v427, %v425
        %v438 = vpack.c.b16 %v428, %v426
        %v439 = vpack.c.b16 %v431, %v429
        %v440 = vpack.c.b16 %v432, %v430
        %v481 = vunpack.c.l.b16 %v371
        %v482 = vunpack.c.h.b16 %v371
        %v483 = vunpack.c.l.b16 %v372
        %v484 = vunpack.c.h.b16 %v372
        %v485 = vunpack.c.l.b16 %v373
        %v486 = vunpack.c.h.b16 %v373
        %v487 = vunpack.c.l.b16 %v374
        %v488 = vunpack.c.h.b16 %v374
        %v489 = vunpack.c.l.b16 %v375
        %v490 = vunpack.c.h.b16 %v375
        %v491 = vunpack.c.l.b16 %v376
        %v492 = vunpack.c.h.b16 %v376
        %v493 = vunpack.c.l.b16 %v377
        %v494 = vunpack.c.h.b16 %v377
        %v495 = vunpack.c.l.b16 %v378
        %v496 = vunpack.c.h.b16 %v378
        %v497 = vunpack.c.l.b16 %v379
        %v498 = vunpack.c.h.b16 %v379
        %v499 = vunpack.c.l.b16 %v380
        %v500 = vunpack.c.h.b16 %v380
        %v501 = vunpack.c.l.b16 %v381
        %v502 = vunpack.c.h.b16 %v381
        %v503 = vunpack.c.l.b16 %v382
        %v504 = vunpack.c.h.b16 %v382
        %v505 = vunpack.c.l.b16 %v383
        %v506 = vunpack.c.h.b16 %v383
        %v507 = vunpack.c.l.b16 %v384
        %v508 = vunpack.c.h.b16 %v384
        %v509 = vunpack.c.l.b16 %v385
        %v510 = vunpack.c.h.b16 %v385
        %v511 = vunpack.c.l.b16 %v386
        %v512 = vunpack.c.h.b16 %v386
        %v513 = vunpack.c.l.b16 %v387
        %v514 = vunpack.c.h.b16 %v387
        %v515 = vunpack.c.l.b16 %v388
        %v516 = vunpack.c.h.b16 %v388
        %v517 = vunpack.c.l.b16 %v389
        %v518 = vunpack.c.h.b16 %v389
        %v519 = vunpack.c.l.b16 %v390
        %v520 = vunpack.c.h.b16 %v390
        %v521 = vunpack.c.l.b16 %v391
        %v522 = vunpack.c.h.b16 %v391
        %v523 = vunpack.c.l.b16 %v392
        %v524 = vunpack.c.h.b16 %v392
        %v525 = vunpack.c.l.b16 %v393
        %v526 = vunpack.c.h.b16 %v393
        %v527 = vunpack.c.l.b16 %v394
        %v528 = vunpack.c.h.b16 %v394
        %v529 = vunpack.c.l.b16 %v395
        %v530 = vunpack.c.h.b16 %v395
        %v531 = vunpack.c.l.b16 %v396
        %v532 = vunpack.c.h.b16 %v396
        %v533 = vunpack.c.l.b16 %v397
        %v534 = vunpack.c.h.b16 %v397
        %v535 = vunpack.c.l.b16 %v398
        %v536 = vunpack.c.h.b16 %v398
        %v537 = vunpack.c.l.b16 %v399
        %v538 = vunpack.c.h.b16 %v399
        %v539 = vunpack.c.l.b16 %v400
        %v540 = vunpack.c.h.b16 %v400
        %v541 = vunpack.c.l.b16 %v401
        %v542 = vunpack.c.h.b16 %v401
        %v543 = vunpack.c.l.b16 %v402
        %v544 = vunpack.c.h.b16 %v402
        %v545 = vpack.c.b16 %v483, %v481
        %v546 = vpack.c.b16 %v484, %v482
        %v547 = vpack.c.b16 %v487, %v485
        %v548 = vpack.c.b16 %v488, %v486
        %v549 = vpack.c.b16 %v491, %v489
        %v550 = vpack.c.b16 %v492, %v490
        %v551 = vpack.c.b16 %v495, %v493
        %v552 = vpack.c.b16 %v496, %v494
        %v553 = vpack.c.b16 %v499, %v497
        %v554 = vpack.c.b16 %v500, %v498
        %v555 = vpack.c.b16 %v503, %v501
        %v556 = vpack.c.b16 %v504, %v502
        %v557 = vpack.c.b16 %v507, %v505
        %v558 = vpack.c.b16 %v508, %v506
        %v559 = vpack.c.b16 %v511, %v509
        %v560 = vpack.c.b16 %v512, %v510
        %v561 = vpack.c.b16 %v515, %v513
        %v562 = vpack.c.b16 %v516, %v514
        %v563 = vpack.c.b16 %v519, %v517
        %v564 = vpack.c.b16 %v520, %v518
        %v565 = vpack.c.b16 %v523, %v521
        %v566 = vpack.c.b16 %v524, %v522
        %v567 = vpack.c.b16 %v527, %v525
        %v568 = vpack.c.b16 %v528, %v526
        %v569 = vpack.c.b16 %v531, %v529
        %v570 = vpack.c.b16 %v532, %v530
        %v571 = vpack.c.b16 %v535, %v533
        %v572 = vpack.c.b16 %v536, %v534
        %v573 = vpack.c.b16 %v539, %v537
        %v574 = vpack.c.b16 %v540, %v538
        %v575 = vpack.c.b16 %v543, %v541
        %v576 = vpack.c.b16 %v544, %v542
        %609 = vmatpush.bf16.msra.mxu0 %v559
        %610 = vmatpush.bf16.msra.mxu0 %v557
        %611 = vmatpush.bf16.msra.mxu0 %v555
        %612 = vmatpush.bf16.msra.mxu0 %v553
        %613 = vmatpush.bf16.msra.mxu0 %v551
        %614 = vmatpush.bf16.msra.mxu0 %v549
        %615 = vmatpush.bf16.msra.mxu0 %v547
        %616 = vmatpush.bf16.msra.mxu0 %v545
        %617 = vmatmul.bf16.gmra.mxu0 %v433
        %v618 = vpop.f32.mrf.mxu0
        %v619 = vadd.f32 %v405, %v618
        %v620 = vpop.f32.mrf.mxu0
        %v621 = vadd.f32 %v405, %v620
        %622 = vmatmul.bf16.gmra.mxu0 %v435
        %v623 = vpop.f32.mrf.mxu0
        %v624 = vadd.f32 %v405, %v623
        %v625 = vpop.f32.mrf.mxu0
        %v626 = vadd.f32 %v405, %v625
        %627 = vmatmul.bf16.gmra.mxu0 %v437
        %v628 = vpop.f32.mrf.mxu0
        %v629 = vadd.f32 %v405, %v628
        %v630 = vpop.f32.mrf.mxu0
        %v631 = vadd.f32 %v405, %v630
        %632 = vmatmul.bf16.gmra.mxu0 %v439
        %v633 = vpop.f32.mrf.mxu0
        %v634 = vadd.f32 %v405, %v633
        %v635 = vpop.f32.mrf.mxu0
        %v636 = vadd.f32 %v405, %v635
        %637 = vdwg.mxu0
        %638 = vmatpush.bf16.msra.mxu0 %v575
        %639 = vmatpush.bf16.msra.mxu0 %v573
        %640 = vmatpush.bf16.msra.mxu0 %v571
        %641 = vmatpush.bf16.msra.mxu0 %v569
        %642 = vmatpush.bf16.msra.mxu0 %v567
        %643 = vmatpush.bf16.msra.mxu0 %v565
        %644 = vmatpush.bf16.msra.mxu0 %v563
        %645 = vmatpush.bf16.msra.mxu0 %v561
        %646 = vmatmul.bf16.gmra.mxu0 %v434
        %v647 = vpop.f32.mrf.mxu0
        %v648 = vadd.f32 %v619, %v647
        %v649 = vpop.f32.mrf.mxu0
        %v650 = vadd.f32 %v621, %v649
        %651 = vmatmul.bf16.gmra.mxu0 %v436
        %v652 = vpop.f32.mrf.mxu0
        %v653 = vadd.f32 %v624, %v652
        %v654 = vpop.f32.mrf.mxu0
        %v655 = vadd.f32 %v626, %v654
        %656 = vmatmul.bf16.gmra.mxu0 %v438
        %v657 = vpop.f32.mrf.mxu0
        %v658 = vadd.f32 %v629, %v657
        %v659 = vpop.f32.mrf.mxu0
        %v660 = vadd.f32 %v631, %v659
        %661 = vmatmul.bf16.gmra.mxu0 %v440
        %v662 = vpop.f32.mrf.mxu0
        %v663 = vadd.f32 %v634, %v662
        %v664 = vpop.f32.mrf.mxu0
        %v665 = vadd.f32 %v636, %v664
        %666 = vdwg.mxu0
        %667 = vmatpush.bf16.msra.mxu0 %v560
        %668 = vmatpush.bf16.msra.mxu0 %v558
        %669 = vmatpush.bf16.msra.mxu0 %v556
        %670 = vmatpush.bf16.msra.mxu0 %v554
        %671 = vmatpush.bf16.msra.mxu0 %v552
        %672 = vmatpush.bf16.msra.mxu0 %v550
        %673 = vmatpush.bf16.msra.mxu0 %v548
        %674 = vmatpush.bf16.msra.mxu0 %v546
        %675 = vmatmul.bf16.gmra.mxu0 %v433
        %v676 = vpop.f32.mrf.mxu0
        %v677 = vadd.f32 %v406, %v676
        %v678 = vpop.f32.mrf.mxu0
        %v679 = vadd.f32 %v406, %v678
        %680 = vmatmul.bf16.gmra.mxu0 %v435
        %v681 = vpop.f32.mrf.mxu0
        %v682 = vadd.f32 %v406, %v681
        %v683 = vpop.f32.mrf.mxu0
        %v684 = vadd.f32 %v406, %v683
        %685 = vmatmul.bf16.gmra.mxu0 %v437
        %v686 = vpop.f32.mrf.mxu0
        %v687 = vadd.f32 %v406, %v686
        %v688 = vpop.f32.mrf.mxu0
        %v689 = vadd.f32 %v406, %v688
        %690 = vmatmul.bf16.gmra.mxu0 %v439
        %v691 = vpop.f32.mrf.mxu0
        %v692 = vadd.f32 %v406, %v691
        %v693 = vpop.f32.mrf.mxu0
        %v694 = vadd.f32 %v406, %v693
        %695 = vdwg.mxu0
        %696 = vmatpush.bf16.msra.mxu0 %v576
        %697 = vmatpush.bf16.msra.mxu0 %v574
        %698 = vmatpush.bf16.msra.mxu0 %v572
        %699 = vmatpush.bf16.msra.mxu0 %v570
        %700 = vmatpush.bf16.msra.mxu0 %v568
        %701 = vmatpush.bf16.msra.mxu0 %v566
        %702 = vmatpush.bf16.msra.mxu0 %v564
        %703 = vmatpush.bf16.msra.mxu0 %v562
        %704 = vmatmul.bf16.gmra.mxu0 %v434
        %v705 = vpop.f32.mrf.mxu0
        %v706 = vadd.f32 %v677, %v705
        %v707 = vpop.f32.mrf.mxu0
        %v708 = vadd.f32 %v679, %v707
        %709 = vmatmul.bf16.gmra.mxu0 %v436
        %v710 = vpop.f32.mrf.mxu0
        %v711 = vadd.f32 %v682, %v710
        %v712 = vpop.f32.mrf.mxu0
        %v713 = vadd.f32 %v684, %v712
        %714 = vmatmul.bf16.gmra.mxu0 %v438
        %v715 = vpop.f32.mrf.mxu0
        %v716 = vadd.f32 %v687, %v715
        %v717 = vpop.f32.mrf.mxu0
        %v718 = vadd.f32 %v689, %v717
        %719 = vmatmul.bf16.gmra.mxu0 %v440
        %v720 = vpop.f32.mrf.mxu0
        %v721 = vadd.f32 %v692, %v720
        %v722 = vpop.f32.mrf.mxu0
        %v723 = vadd.f32 %v694, %v722
        %724 = vdwg.mxu0
        %v725 = vmax.f32 %v648, 0.0
        %v726 = vmax.f32 %v706, 0.0
        %v727 = vmax.f32 %v650, 0.0
        %v728 = vmax.f32 %v708, 0.0
        %v729 = vmax.f32 %v653, 0.0
        %v730 = vmax.f32 %v711, 0.0
        %v731 = vmax.f32 %v655, 0.0
        %v732 = vmax.f32 %v713, 0.0
        %v733 = vmax.f32 %v658, 0.0
        %v734 = vmax.f32 %v716, 0.0
        %v735 = vmax.f32 %v660, 0.0
        %v736 = vmax.f32 %v718, 0.0
        %v737 = vmax.f32 %v663, 0.0
        %v738 = vmax.f32 %v721, 0.0
        %v739 = vmax.f32 %v665, 0.0
        %v740 = vmax.f32 %v723, 0.0
        %741 = vst [vmem:[#allocation2] sm:$0xff] %v725
        %742 = vst [vmem:[#allocation2 + $0x8] sm:$0xff] %v726
        %743 = vst [vmem:[#allocation2 + $0x10] sm:$0xff] %v727
        %744 = vst [vmem:[#allocation2 + $0x18] sm:$0xff] %v728
        %745 = vst [vmem:[#allocation2 + $0x20] sm:$0xff] %v729
        %746 = vst [vmem:[#allocation2 + $0x28] sm:$0xff] %v730
        %747 = vst [vmem:[#allocation2 + $0x30] sm:$0xff] %v731
        %748 = vst [vmem:[#allocation2 + $0x38] sm:$0xff] %v732
        %749 = vst [vmem:[#allocation2 + $0x40] sm:$0xff] %v733
        %750 = vst [vmem:[#allocation2 + $0x48] sm:$0xff] %v734
        %751 = vst [vmem:[#allocation2 + $0x50] sm:$0xff] %v735
        %752 = vst [vmem:[#allocation2 + $0x58] sm:$0xff] %v736
        %753 = vst [vmem:[#allocation2 + $0x60] sm:$0xff] %v737
        %754 = vst [vmem:[#allocation2 + $0x68] sm:$0xff] %v738
        %755 = vst [vmem:[#allocation2 + $0x70] sm:$0xff] %v739
        %756 = vst [vmem:[#allocation2 + $0x78] sm:$0xff] %v740
      $region56: #{dgmr_forward.1} parent=51 // pred_fallthru
        _
      %v757 = vld [vmem:[#allocation2] sm:$0xff]
      %v758 = vld [vmem:[#allocation2 + $0x8] sm:$0xff]
      %v759 = vld [vmem:[#allocation2 + $0x10] sm:$0xff]
      %v760 = vld [vmem:[#allocation2 + $0x18] sm:$0xff]
      %v761 = vld [vmem:[#allocation2 + $0x20] sm:$0xff]
      %v762 = vld [vmem:[#allocation2 + $0x28] sm:$0xff]
      %v763 = vld [vmem:[#allocation2 + $0x30] sm:$0xff]
      %v764 = vld [vmem:[#allocation2 + $0x38] sm:$0xff]
      %v765 = vld [vmem:[#allocation2 + $0x40] sm:$0xff]
      %v766 = vld [vmem:[#allocation2 + $0x48] sm:$0xff]
      %v767 = vld [vmem:[#allocation2 + $0x50] sm:$0xff]
      %v768 = vld [vmem:[#allocation2 + $0x58] sm:$0xff]
      %v769 = vld [vmem:[#allocation2 + $0x60] sm:$0xff]
      %v770 = vld [vmem:[#allocation2 + $0x68] sm:$0xff]
      %v771 = vld [vmem:[#allocation2 + $0x70] sm:$0xff]
      %v772 = vld [vmem:[#allocation2 + $0x78] sm:$0xff]
      %v773 = vpack.c.bf16 %v759, %v757
      %v774 = vpack.c.bf16 %v760, %v758
      %v775 = vpack.c.bf16 %v763, %v761
      %v776 = vpack.c.bf16 %v764, %v762
      %v777 = vpack.c.bf16 %v767, %v765
      %v778 = vpack.c.bf16 %v768, %v766
      %v779 = vpack.c.bf16 %v771, %v769
      %v780 = vpack.c.bf16 %v772, %v770
      %v781 = vld [vmem:[%s4] sm:$0xff]
      %v782 = vld [vmem:[%s4 + $0x8] sm:$0xff]
      %v783 = vld [vmem:[%s4 + $0x10] sm:$0xff]
      %v784 = vld [vmem:[%s4 + $0x18] sm:$0xff]
      %v785 = vld [vmem:[%s4 + $0x20] sm:$0xff]
      %v786 = vld [vmem:[%s4 + $0x28] sm:$0xff]
      %v787 = vld [vmem:[%s4 + $0x30] sm:$0xff]
      %v788 = vld [vmem:[%s4 + $0x38] sm:$0xff]
      %v789 = vld [vmem:[%s4 + $0x40] sm:$0xff]
      %v790 = vld [vmem:[%s4 + $0x48] sm:$0xff]
      %v791 = vld [vmem:[%s4 + $0x50] sm:$0xff]
      %v792 = vld [vmem:[%s4 + $0x58] sm:$0xff]
      %v793 = vld [vmem:[%s4 + $0x60] sm:$0xff]
      %v794 = vld [vmem:[%s4 + $0x68] sm:$0xff]
      %v795 = vld [vmem:[%s4 + $0x70] sm:$0xff]
      %v796 = vld [vmem:[%s4 + $0x78] sm:$0xff]
      %v797 = vld [vmem:[%s4 + $0x80] sm:$0xff]
      %v798 = vld [vmem:[%s4 + $0x88] sm:$0xff]
      %v799 = vld [vmem:[%s4 + $0x90] sm:$0xff]
      %v800 = vld [vmem:[%s4 + $0x98] sm:$0xff]
      %v801 = vld [vmem:[%s4 + $0xa0] sm:$0xff]
      %v802 = vld [vmem:[%s4 + $0xa8] sm:$0xff]
      %v803 = vld [vmem:[%s4 + $0xb0] sm:$0xff]
      %v804 = vld [vmem:[%s4 + $0xb8] sm:$0xff]
      %v805 = vld [vmem:[%s4 + $0xc0] sm:$0xff]
      %v806 = vld [vmem:[%s4 + $0xc8] sm:$0xff]
      %v807 = vld [vmem:[%s4 + $0xd0] sm:$0xff]
      %v808 = vld [vmem:[%s4 + $0xd8] sm:$0xff]
      %v809 = vld [vmem:[%s4 + $0xe0] sm:$0xff]
      %v810 = vld [vmem:[%s4 + $0xe8] sm:$0xff]
      %v811 = vld [vmem:[%s4 + $0xf0] sm:$0xff]
      %v812 = vld [vmem:[%s4 + $0xf8] sm:$0xff]
      %v813 = vld [vmem:[%s4 + $0x100] sm:$0xff]
      %v814 = vld [vmem:[%s4 + $0x108] sm:$0xff]
      %v815 = vld [vmem:[%s4 + $0x110] sm:$0xff]
      %v816 = vld [vmem:[%s4 + $0x118] sm:$0xff]
      %v817 = vld [vmem:[%s4 + $0x120] sm:$0xff]
      %v818 = vld [vmem:[%s4 + $0x128] sm:$0xff]
      %v819 = vld [vmem:[%s4 + $0x130] sm:$0xff]
      %v820 = vld [vmem:[%s4 + $0x138] sm:$0xff]
      %v821 = vld [vmem:[%s4 + $0x140] sm:$0xff]
      %v822 = vld [vmem:[%s4 + $0x148] sm:$0xff]
      %v823 = vld [vmem:[%s4 + $0x150] sm:$0xff]
      %v824 = vld [vmem:[%s4 + $0x158] sm:$0xff]
      %v825 = vld [vmem:[%s4 + $0x160] sm:$0xff]
      %v826 = vld [vmem:[%s4 + $0x168] sm:$0xff]
      %v827 = vld [vmem:[%s4 + $0x170] sm:$0xff]
      %v828 = vld [vmem:[%s4 + $0x178] sm:$0xff]
      %v829 = vld [vmem:[%s4 + $0x180] sm:$0xff]
      %v830 = vld [vmem:[%s4 + $0x188] sm:$0xff]
      %v831 = vld [vmem:[%s4 + $0x190] sm:$0xff]
      %v832 = vld [vmem:[%s4 + $0x198] sm:$0xff]
      %v833 = vld [vmem:[%s4 + $0x1a0] sm:$0xff]
      %v834 = vld [vmem:[%s4 + $0x1a8] sm:$0xff]
      %v835 = vld [vmem:[%s4 + $0x1b0] sm:$0xff]
      %v836 = vld [vmem:[%s4 + $0x1b8] sm:$0xff]
      %v837 = vld [vmem:[%s4 + $0x1c0] sm:$0xff]
      %v838 = vld [vmem:[%s4 + $0x1c8] sm:$0xff]
      %v839 = vld [vmem:[%s4 + $0x1d0] sm:$0xff]
      %v840 = vld [vmem:[%s4 + $0x1d8] sm:$0xff]
      %v841 = vld [vmem:[%s4 + $0x1e0] sm:$0xff]
      %v842 = vld [vmem:[%s4 + $0x1e8] sm:$0xff]
      %v843 = vld [vmem:[%s4 + $0x1f0] sm:$0xff]
      %v844 = vld [vmem:[%s4 + $0x1f8] sm:$0xff]
      %v909 = vunpack.c.l.b16 %v781
      %v910 = vunpack.c.h.b16 %v781
      %v911 = vunpack.c.l.b16 %v782
      %v912 = vunpack.c.h.b16 %v782
      %v913 = vunpack.c.l.b16 %v783
      %v914 = vunpack.c.h.b16 %v783
      %v915 = vunpack.c.l.b16 %v784
      %v916 = vunpack.c.h.b16 %v784
      %v917 = vunpack.c.l.b16 %v785
      %v918 = vunpack.c.h.b16 %v785
      %v919 = vunpack.c.l.b16 %v786
      %v920 = vunpack.c.h.b16 %v786
      %v921 = vunpack.c.l.b16 %v787
      %v922 = vunpack.c.h.b16 %v787
      %v923 = vunpack.c.l.b16 %v788
      %v924 = vunpack.c.h.b16 %v788
      %v925 = vunpack.c.l.b16 %v789
      %v926 = vunpack.c.h.b16 %v789
      %v927 = vunpack.c.l.b16 %v790
      %v928 = vunpack.c.h.b16 %v790
      %v929 = vunpack.c.l.b16 %v791
      %v930 = vunpack.c.h.b16 %v791
      %v931 = vunpack.c.l.b16 %v792
      %v932 = vunpack.c.h.b16 %v792
      %v933 = vunpack.c.l.b16 %v793
      %v934 = vunpack.c.h.b16 %v793
      %v935 = vunpack.c.l.b16 %v794
      %v936 = vunpack.c.h.b16 %v794
      %v937 = vunpack.c.l.b16 %v795
      %v938 = vunpack.c.h.b16 %v795
      %v939 = vunpack.c.l.b16 %v796
      %v940 = vunpack.c.h.b16 %v796
      %v941 = vunpack.c.l.b16 %v797
      %v942 = vunpack.c.h.b16 %v797
      %v943 = vunpack.c.l.b16 %v798
      %v944 = vunpack.c.h.b16 %v798
      %v945 = vunpack.c.l.b16 %v799
      %v946 = vunpack.c.h.b16 %v799
      %v947 = vunpack.c.l.b16 %v800
      %v948 = vunpack.c.h.b16 %v800
      %v949 = vunpack.c.l.b16 %v801
      %v950 = vunpack.c.h.b16 %v801
      %v951 = vunpack.c.l.b16 %v802
      %v952 = vunpack.c.h.b16 %v802
      %v953 = vunpack.c.l.b16 %v803
      %v954 = vunpack.c.h.b16 %v803
      %v955 = vunpack.c.l.b16 %v804
      %v956 = vunpack.c.h.b16 %v804
      %v957 = vunpack.c.l.b16 %v805
      %v958 = vunpack.c.h.b16 %v805
      %v959 = vunpack.c.l.b16 %v806
      %v960 = vunpack.c.h.b16 %v806
      %v961 = vunpack.c.l.b16 %v807
      %v962 = vunpack.c.h.b16 %v807
      %v963 = vunpack.c.l.b16 %v808
      %v964 = vunpack.c.h.b16 %v808
      %v965 = vunpack.c.l.b16 %v809
      %v966 = vunpack.c.h.b16 %v809
      %v967 = vunpack.c.l.b16 %v810
      %v968 = vunpack.c.h.b16 %v810
      %v969 = vunpack.c.l.b16 %v811
      %v970 = vunpack.c.h.b16 %v811
      %v971 = vunpack.c.l.b16 %v812
      %v972 = vunpack.c.h.b16 %v812
      %v973 = vunpack.c.l.b16 %v813
      %v974 = vunpack.c.h.b16 %v813
      %v975 = vunpack.c.l.b16 %v814
      %v976 = vunpack.c.h.b16 %v814
      %v977 = vunpack.c.l.b16 %v815
      %v978 = vunpack.c.h.b16 %v815
      %v979 = vunpack.c.l.b16 %v816
      %v980 = vunpack.c.h.b16 %v816
      %v981 = vunpack.c.l.b16 %v817
      %v982 = vunpack.c.h.b16 %v817
      %v983 = vunpack.c.l.b16 %v818
      %v984 = vunpack.c.h.b16 %v818
      %v985 = vunpack.c.l.b16 %v819
      %v986 = vunpack.c.h.b16 %v819
      %v987 = vunpack.c.l.b16 %v820
      %v988 = vunpack.c.h.b16 %v820
      %v989 = vunpack.c.l.b16 %v821
      %v990 = vunpack.c.h.b16 %v821
      %v991 = vunpack.c.l.b16 %v822
      %v992 = vunpack.c.h.b16 %v822
      %v993 = vunpack.c.l.b16 %v823
      %v994 = vunpack.c.h.b16 %v823
      %v995 = vunpack.c.l.b16 %v824
      %v996 = vunpack.c.h.b16 %v824
      %v997 = vunpack.c.l.b16 %v825
      %v998 = vunpack.c.h.b16 %v825
      %v999 = vunpack.c.l.b16 %v826
      %v1000 = vunpack.c.h.b16 %v826
      %v1001 = vunpack.c.l.b16 %v827
      %v1002 = vunpack.c.h.b16 %v827
      %v1003 = vunpack.c.l.b16 %v828
      %v1004 = vunpack.c.h.b16 %v828
      %v1005 = vunpack.c.l.b16 %v829
      %v1006 = vunpack.c.h.b16 %v829
      %v1007 = vunpack.c.l.b16 %v830
      %v1008 = vunpack.c.h.b16 %v830
      %v1009 = vunpack.c.l.b16 %v831
      %v1010 = vunpack.c.h.b16 %v831
      %v1011 = vunpack.c.l.b16 %v832
      %v1012 = vunpack.c.h.b16 %v832
      %v1013 = vunpack.c.l.b16 %v833
      %v1014 = vunpack.c.h.b16 %v833
      %v1015 = vunpack.c.l.b16 %v834
      %v1016 = vunpack.c.h.b16 %v834
      %v1017 = vunpack.c.l.b16 %v835
      %v1018 = vunpack.c.h.b16 %v835
      %v1019 = vunpack.c.l.b16 %v836
      %v1020 = vunpack.c.h.b16 %v836
      %v1021 = vunpack.c.l.b16 %v837
      %v1022 = vunpack.c.h.b16 %v837
      %v1023 = vunpack.c.l.b16 %v838
      %v1024 = vunpack.c.h.b16 %v838
      %v1025 = vunpack.c.l.b16 %v839
      %v1026 = vunpack.c.h.b16 %v839
      %v1027 = vunpack.c.l.b16 %v840
      %v1028 = vunpack.c.h.b16 %v840
      %v1029 = vunpack.c.l.b16 %v841
      %v1030 = vunpack.c.h.b16 %v841
      %v1031 = vunpack.c.l.b16 %v842
      %v1032 = vunpack.c.h.b16 %v842
      %v1033 = vunpack.c.l.b16 %v843
      %v1034 = vunpack.c.h.b16 %v843
      %v1035 = vunpack.c.l.b16 %v844
      %v1036 = vunpack.c.h.b16 %v844
      %v1037 = vpack.c.b16 %v913, %v909
      %v1038 = vpack.c.b16 %v914, %v910
      %v1039 = vpack.c.b16 %v915, %v911
      %v1040 = vpack.c.b16 %v916, %v912
      %v1041 = vpack.c.b16 %v921, %v917
      %v1042 = vpack.c.b16 %v922, %v918
      %v1043 = vpack.c.b16 %v923, %v919
      %v1044 = vpack.c.b16 %v924, %v920
      %v1045 = vpack.c.b16 %v929, %v925
      %v1046 = vpack.c.b16 %v930, %v926
      %v1047 = vpack.c.b16 %v931, %v927
      %v1048 = vpack.c.b16 %v932, %v928
      %v1049 = vpack.c.b16 %v937, %v933
      %v1050 = vpack.c.b16 %v938, %v934
      %v1051 = vpack.c.b16 %v939, %v935
      %v1052 = vpack.c.b16 %v940, %v936
      %v1053 = vpack.c.b16 %v945, %v941
      %v1054 = vpack.c.b16 %v946, %v942
      %v1055 = vpack.c.b16 %v947, %v943
      %v1056 = vpack.c.b16 %v948, %v944
      %v1057 = vpack.c.b16 %v953, %v949
      %v1058 = vpack.c.b16 %v954, %v950
      %v1059 = vpack.c.b16 %v955, %v951
      %v1060 = vpack.c.b16 %v956, %v952
      %v1061 = vpack.c.b16 %v961, %v957
      %v1062 = vpack.c.b16 %v962, %v958
      %v1063 = vpack.c.b16 %v963, %v959
      %v1064 = vpack.c.b16 %v964, %v960
      %v1065 = vpack.c.b16 %v969, %v965
      %v1066 = vpack.c.b16 %v970, %v966
      %v1067 = vpack.c.b16 %v971, %v967
      %v1068 = vpack.c.b16 %v972, %v968
      %v1069 = vpack.c.b16 %v977, %v973
      %v1070 = vpack.c.b16 %v978, %v974
      %v1071 = vpack.c.b16 %v979, %v975
      %v1072 = vpack.c.b16 %v980, %v976
      %v1073 = vpack.c.b16 %v985, %v981
      %v1074 = vpack.c.b16 %v986, %v982
      %v1075 = vpack.c.b16 %v987, %v983
      %v1076 = vpack.c.b16 %v988, %v984
      %v1077 = vpack.c.b16 %v993, %v989
      %v1078 = vpack.c.b16 %v994, %v990
      %v1079 = vpack.c.b16 %v995, %v991
      %v1080 = vpack.c.b16 %v996, %v992
      %v1081 = vpack.c.b16 %v1001, %v997
      %v1082 = vpack.c.b16 %v1002, %v998
      %v1083 = vpack.c.b16 %v1003, %v999
      %v1084 = vpack.c.b16 %v1004, %v1000
      %v1085 = vpack.c.b16 %v1009, %v1005
      %v1086 = vpack.c.b16 %v1010, %v1006
      %v1087 = vpack.c.b16 %v1011, %v1007
      %v1088 = vpack.c.b16 %v1012, %v1008
      %v1089 = vpack.c.b16 %v1017, %v1013
      %v1090 = vpack.c.b16 %v1018, %v1014
      %v1091 = vpack.c.b16 %v1019, %v1015
      %v1092 = vpack.c.b16 %v1020, %v1016
      %v1093 = vpack.c.b16 %v1025, %v1021
      %v1094 = vpack.c.b16 %v1026, %v1022
      %v1095 = vpack.c.b16 %v1027, %v1023
      %v1096 = vpack.c.b16 %v1028, %v1024
      %v1097 = vpack.c.b16 %v1033, %v1029
      %v1098 = vpack.c.b16 %v1034, %v1030
      %v1099 = vpack.c.b16 %v1035, %v1031
      %v1100 = vpack.c.b16 %v1036, %v1032
      %1165 = vmatpush.bf16.msra.mxu0 %v1065
      %1166 = vmatpush.bf16.msra.mxu0 %v1061
      %1167 = vmatpush.bf16.msra.mxu0 %v1057
      %1168 = vmatpush.bf16.msra.mxu0 %v1053
      %1169 = vmatpush.bf16.msra.mxu0 %v1049
      %1170 = vmatpush.bf16.msra.mxu0 %v1045
      %1171 = vmatpush.bf16.msra.mxu0 %v1041
      %1172 = vmatpush.bf16.msra.mxu0 %v1037
      %1173 = vmatmul.bf16.gmra.mxu0 %v773
      %v1174 = vpop.f32.mrf.mxu0
      %v1175 = vadd.f32 0.0, %v1174
      %v1176 = vpop.f32.mrf.mxu0
      %v1177 = vadd.f32 0.0, %v1176
      %1178 = vmatmul.bf16.gmra.mxu0 %v775
      %v1179 = vpop.f32.mrf.mxu0
      %v1180 = vadd.f32 0.0, %v1179
      %v1181 = vpop.f32.mrf.mxu0
      %v1182 = vadd.f32 0.0, %v1181
      %1183 = vmatmul.bf16.gmra.mxu0 %v777
      %v1184 = vpop.f32.mrf.mxu0
      %v1185 = vadd.f32 0.0, %v1184
      %v1186 = vpop.f32.mrf.mxu0
      %v1187 = vadd.f32 0.0, %v1186
      %1188 = vmatmul.bf16.gmra.mxu0 %v779
      %v1189 = vpop.f32.mrf.mxu0
      %v1190 = vadd.f32 0.0, %v1189
      %v1191 = vpop.f32.mrf.mxu0
      %v1192 = vadd.f32 0.0, %v1191
      %1193 = vdwg.mxu0
      %1194 = vmatpush.bf16.msra.mxu0 %v1097
      %1195 = vmatpush.bf16.msra.mxu0 %v1093
      %1196 = vmatpush.bf16.msra.mxu0 %v1089
      %1197 = vmatpush.bf16.msra.mxu0 %v1085
      %1198 = vmatpush.bf16.msra.mxu0 %v1081
      %1199 = vmatpush.bf16.msra.mxu0 %v1077
      %1200 = vmatpush.bf16.msra.mxu0 %v1073
      %1201 = vmatpush.bf16.msra.mxu0 %v1069
      %1202 = vmatmul.bf16.gmra.mxu0 %v774
      %v1203 = vpop.f32.mrf.mxu0
      %v1204 = vadd.f32 %v1175, %v1203
      %v1205 = vpop.f32.mrf.mxu0
      %v1206 = vadd.f32 %v1177, %v1205
      %1207 = vmatmul.bf16.gmra.mxu0 %v776
      %v1208 = vpop.f32.mrf.mxu0
      %v1209 = vadd.f32 %v1180, %v1208
      %v1210 = vpop.f32.mrf.mxu0
      %v1211 = vadd.f32 %v1182, %v1210
      %1212 = vmatmul.bf16.gmra.mxu0 %v778
      %v1213 = vpop.f32.mrf.mxu0
      %v1214 = vadd.f32 %v1185, %v1213
      %v1215 = vpop.f32.mrf.mxu0
      %v1216 = vadd.f32 %v1187, %v1215
      %1217 = vmatmul.bf16.gmra.mxu0 %v780
      %v1218 = vpop.f32.mrf.mxu0
      %v1219 = vadd.f32 %v1190, %v1218
      %v1220 = vpop.f32.mrf.mxu0
      %v1221 = vadd.f32 %v1192, %v1220
      %1222 = vdwg.mxu0
      %1223 = vmatpush.bf16.msra.mxu0 %v1066
      %1224 = vmatpush.bf16.msra.mxu0 %v1062
      %1225 = vmatpush.bf16.msra.mxu0 %v1058
      %1226 = vmatpush.bf16.msra.mxu0 %v1054
      %1227 = vmatpush.bf16.msra.mxu0 %v1050
      %1228 = vmatpush.bf16.msra.mxu0 %v1046
      %1229 = vmatpush.bf16.msra.mxu0 %v1042
      %1230 = vmatpush.bf16.msra.mxu0 %v1038
      %1231 = vmatmul.bf16.gmra.mxu0 %v773
      %v1232 = vpop.f32.mrf.mxu0
      %v1233 = vadd.f32 0.0, %v1232
      %v1234 = vpop.f32.mrf.mxu0
      %v1235 = vadd.f32 0.0, %v1234
      %1236 = vmatmul.bf16.gmra.mxu0 %v775
      %v1237 = vpop.f32.mrf.mxu0
      %v1238 = vadd.f32 0.0, %v1237
      %v1239 = vpop.f32.mrf.mxu0
      %v1240 = vadd.f32 0.0, %v1239
      %1241 = vmatmul.bf16.gmra.mxu0 %v777
      %v1242 = vpop.f32.mrf.mxu0
      %v1243 = vadd.f32 0.0, %v1242
      %v1244 = vpop.f32.mrf.mxu0
      %v1245 = vadd.f32 0.0, %v1244
      %1246 = vmatmul.bf16.gmra.mxu0 %v779
      %v1247 = vpop.f32.mrf.mxu0
      %v1248 = vadd.f32 0.0, %v1247
      %v1249 = vpop.f32.mrf.mxu0
      %v1250 = vadd.f32 0.0, %v1249
      %1251 = vdwg.mxu0
      %1252 = vmatpush.bf16.msra.mxu0 %v1098
      %1253 = vmatpush.bf16.msra.mxu0 %v1094
      %1254 = vmatpush.bf16.msra.mxu0 %v1090
      %1255 = vmatpush.bf16.msra.mxu0 %v1086
      %1256 = vmatpush.bf16.msra.mxu0 %v1082
      %1257 = vmatpush.bf16.msra.mxu0 %v1078
      %1258 = vmatpush.bf16.msra.mxu0 %v1074
      %1259 = vmatpush.bf16.msra.mxu0 %v1070
      %1260 = vmatmul.bf16.gmra.mxu0 %v774
      %v1261 = vpop.f32.mrf.mxu0
      %v1262 = vadd.f32 %v1233, %v1261
      %v1263 = vpop.f32.mrf.mxu0
      %v1264 = vadd.f32 %v1235, %v1263
      %1265 = vmatmul.bf16.gmra.mxu0 %v776
      %v1266 = vpop.f32.mrf.mxu0
      %v1267 = vadd.f32 %v1238, %v1266
      %v1268 = vpop.f32.mrf.mxu0
      %v1269 = vadd.f32 %v1240, %v1268
      %1270 = vmatmul.bf16.gmra.mxu0 %v778
      %v1271 = vpop.f32.mrf.mxu0
      %v1272 = vadd.f32 %v1243, %v1271
      %v1273 = vpop.f32.mrf.mxu0
      %v1274 = vadd.f32 %v1245, %v1273
      %1275 = vmatmul.bf16.gmra.mxu0 %v780
      %v1276 = vpop.f32.mrf.mxu0
      %v1277 = vadd.f32 %v1248, %v1276
      %v1278 = vpop.f32.mrf.mxu0
      %v1279 = vadd.f32 %v1250, %v1278
      %1280 = vdwg.mxu0
      %1281 = vmatpush.bf16.msra.mxu0 %v1067
      %1282 = vmatpush.bf16.msra.mxu0 %v1063
      %1283 = vmatpush.bf16.msra.mxu0 %v1059
      %1284 = vmatpush.bf16.msra.mxu0 %v1055
      %1285 = vmatpush.bf16.msra.mxu0 %v1051
      %1286 = vmatpush.bf16.msra.mxu0 %v1047
      %1287 = vmatpush.bf16.msra.mxu0 %v1043
      %1288 = vmatpush.bf16.msra.mxu0 %v1039
      %1289 = vmatmul.bf16.gmra.mxu0 %v773
      %v1290 = vpop.f32.mrf.mxu0
      %v1291 = vadd.f32 0.0, %v1290
      %v1292 = vpop.f32.mrf.mxu0
      %v1293 = vadd.f32 0.0, %v1292
      %1294 = vmatmul.bf16.gmra.mxu0 %v775
      %v1295 = vpop.f32.mrf.mxu0
      %v1296 = vadd.f32 0.0, %v1295
      %v1297 = vpop.f32.mrf.mxu0
      %v1298 = vadd.f32 0.0, %v1297
      %1299 = vmatmul.bf16.gmra.mxu0 %v777
      %v1300 = vpop.f32.mrf.mxu0
      %v1301 = vadd.f32 0.0, %v1300
      %v1302 = vpop.f32.mrf.mxu0
      %v1303 = vadd.f32 0.0, %v1302
      %1304 = vmatmul.bf16.gmra.mxu0 %v779
      %v1305 = vpop.f32.mrf.mxu0
      %v1306 = vadd.f32 0.0, %v1305
      %v1307 = vpop.f32.mrf.mxu0
      %v1308 = vadd.f32 0.0, %v1307
      %1309 = vdwg.mxu0
      %1310 = vmatpush.bf16.msra.mxu0 %v1099
      %1311 = vmatpush.bf16.msra.mxu0 %v1095
      %1312 = vmatpush.bf16.msra.mxu0 %v1091
      %1313 = vmatpush.bf16.msra.mxu0 %v1087
      %1314 = vmatpush.bf16.msra.mxu0 %v1083
      %1315 = vmatpush.bf16.msra.mxu0 %v1079
      %1316 = vmatpush.bf16.msra.mxu0 %v1075
      %1317 = vmatpush.bf16.msra.mxu0 %v1071
      %1318 = vmatmul.bf16.gmra.mxu0 %v774
      %v1319 = vpop.f32.mrf.mxu0
      %v1320 = vadd.f32 %v1291, %v1319
      %v1321 = vpop.f32.mrf.mxu0
      %v1322 = vadd.f32 %v1293, %v1321
      %1323 = vmatmul.bf16.gmra.mxu0 %v776
      %v1324 = vpop.f32.mrf.mxu0
      %v1325 = vadd.f32 %v1296, %v1324
      %v1326 = vpop.f32.mrf.mxu0
      %v1327 = vadd.f32 %v1298, %v1326
      %1328 = vmatmul.bf16.gmra.mxu0 %v778
      %v1329 = vpop.f32.mrf.mxu0
      %v1330 = vadd.f32 %v1301, %v1329
      %v1331 = vpop.f32.mrf.mxu0
      %v1332 = vadd.f32 %v1303, %v1331
      %1333 = vmatmul.bf16.gmra.mxu0 %v780
      %v1334 = vpop.f32.mrf.mxu0
      %v1335 = vadd.f32 %v1306, %v1334
      %v1336 = vpop.f32.mrf.mxu0
      %v1337 = vadd.f32 %v1308, %v1336
      %1338 = vdwg.mxu0
      %1339 = vmatpush.bf16.msra.mxu0 %v1068
      %1340 = vmatpush.bf16.msra.mxu0 %v1064
      %1341 = vmatpush.bf16.msra.mxu0 %v1060
      %1342 = vmatpush.bf16.msra.mxu0 %v1056
      %1343 = vmatpush.bf16.msra.mxu0 %v1052
      %1344 = vmatpush.bf16.msra.mxu0 %v1048
      %1345 = vmatpush.bf16.msra.mxu0 %v1044
      %1346 = vmatpush.bf16.msra.mxu0 %v1040
      %1347 = vmatmul.bf16.gmra.mxu0 %v773
      %v1348 = vpop.f32.mrf.mxu0
      %v1349 = vadd.f32 0.0, %v1348
      %v1350 = vpop.f32.mrf.mxu0
      %v1351 = vadd.f32 0.0, %v1350
      %1352 = vmatmul.bf16.gmra.mxu0 %v775
      %v1353 = vpop.f32.mrf.mxu0
      %v1354 = vadd.f32 0.0, %v1353
      %v1355 = vpop.f32.mrf.mxu0
      %v1356 = vadd.f32 0.0, %v1355
      %1357 = vmatmul.bf16.gmra.mxu0 %v777
      %v1358 = vpop.f32.mrf.mxu0
      %v1359 = vadd.f32 0.0, %v1358
      %v1360 = vpop.f32.mrf.mxu0
      %v1361 = vadd.f32 0.0, %v1360
      %1362 = vmatmul.bf16.gmra.mxu0 %v779
      %v1363 = vpop.f32.mrf.mxu0
      %v1364 = vadd.f32 0.0, %v1363
      %v1365 = vpop.f32.mrf.mxu0
      %v1366 = vadd.f32 0.0, %v1365
      %1367 = vdwg.mxu0
      %1368 = vmatpush.bf16.msra.mxu0 %v1100
      %1369 = vmatpush.bf16.msra.mxu0 %v1096
      %1370 = vmatpush.bf16.msra.mxu0 %v1092
      %1371 = vmatpush.bf16.msra.mxu0 %v1088
      %1372 = vmatpush.bf16.msra.mxu0 %v1084
      %1373 = vmatpush.bf16.msra.mxu0 %v1080
      %1374 = vmatpush.bf16.msra.mxu0 %v1076
      %1375 = vmatpush.bf16.msra.mxu0 %v1072
      %1376 = vmatmul.bf16.gmra.mxu0 %v774
      %v1377 = vpop.f32.mrf.mxu0
      %v1378 = vadd.f32 %v1349, %v1377
      %v1379 = vpop.f32.mrf.mxu0
      %v1380 = vadd.f32 %v1351, %v1379
      %1381 = vmatmul.bf16.gmra.mxu0 %v776
      %v1382 = vpop.f32.mrf.mxu0
      %v1383 = vadd.f32 %v1354, %v1382
      %v1384 = vpop.f32.mrf.mxu0
      %v1385 = vadd.f32 %v1356, %v1384
      %1386 = vmatmul.bf16.gmra.mxu0 %v778
      %v1387 = vpop.f32.mrf.mxu0
      %v1388 = vadd.f32 %v1359, %v1387
      %v1389 = vpop.f32.mrf.mxu0
      %v1390 = vadd.f32 %v1361, %v1389
      %1391 = vmatmul.bf16.gmra.mxu0 %v780
      %v1392 = vpop.f32.mrf.mxu0
      %v1393 = vadd.f32 %v1364, %v1392
      %v1394 = vpop.f32.mrf.mxu0
      %v1395 = vadd.f32 %v1366, %v1394
      %1396 = vdwg.mxu0
      %v1397 = vld [vmem:[%s347] sm:$0xff]
      %v1398 = vld [vmem:[%s347 + $0x8] sm:$0xff]
      %v1399 = vld [vmem:[%s347 + $0x10] sm:$0xff]
      %v1400 = vld [vmem:[%s347 + $0x18] sm:$0xff]
      %v1401 = vld [vmem:[%s347 + $0x20] sm:$0xff]
      %v1402 = vld [vmem:[%s347 + $0x28] sm:$0xff]
      %v1403 = vld [vmem:[%s347 + $0x30] sm:$0xff]
      %v1404 = vld [vmem:[%s347 + $0x38] sm:$0xff]
      %v1405 = vld [vmem:[%s347 + $0x40] sm:$0xff]
      %v1406 = vld [vmem:[%s347 + $0x48] sm:$0xff]
      %v1407 = vld [vmem:[%s347 + $0x50] sm:$0xff]
      %v1408 = vld [vmem:[%s347 + $0x58] sm:$0xff]
      %v1409 = vld [vmem:[%s347 + $0x60] sm:$0xff]
      %v1410 = vld [vmem:[%s347 + $0x68] sm:$0xff]
      %v1411 = vld [vmem:[%s347 + $0x70] sm:$0xff]
      %v1412 = vld [vmem:[%s347 + $0x78] sm:$0xff]
      %v1413 = vld [vmem:[%s347 + $0x80] sm:$0xff]
      %v1414 = vld [vmem:[%s347 + $0x88] sm:$0xff]
      %v1415 = vld [vmem:[%s347 + $0x90] sm:$0xff]
      %v1416 = vld [vmem:[%s347 + $0x98] sm:$0xff]
      %v1417 = vld [vmem:[%s347 + $0xa0] sm:$0xff]
      %v1418 = vld [vmem:[%s347 + $0xa8] sm:$0xff]
      %v1419 = vld [vmem:[%s347 + $0xb0] sm:$0xff]
      %v1420 = vld [vmem:[%s347 + $0xb8] sm:$0xff]
      %v1421 = vunpack.c.l.bf16 %v1397
      %v1422 = vunpack.c.h.bf16 %v1397
      %v1423 = vunpack.c.l.bf16 %v1398
      %v1424 = vunpack.c.h.bf16 %v1398
      %v1425 = vunpack.c.l.bf16 %v1399
      %v1426 = vunpack.c.h.bf16 %v1399
      %v1427 = vunpack.c.l.bf16 %v1400
      %v1428 = vunpack.c.h.bf16 %v1400
      %v1429 = vunpack.c.l.bf16 %v1401
      %v1430 = vunpack.c.h.bf16 %v1401
      %v1431 = vunpack.c.l.bf16 %v1402
      %v1432 = vunpack.c.h.bf16 %v1402
      %v1433 = vunpack.c.l.bf16 %v1403
      %v1434 = vunpack.c.h.bf16 %v1403
      %v1435 = vunpack.c.l.bf16 %v1404
      %v1436 = vunpack.c.h.bf16 %v1404
      %v1437 = vunpack.c.l.bf16 %v1405
      %v1438 = vunpack.c.h.bf16 %v1405
      %v1439 = vunpack.c.l.bf16 %v1406
      %v1440 = vunpack.c.h.bf16 %v1406
      %v1441 = vunpack.c.l.bf16 %v1407
      %v1442 = vunpack.c.h.bf16 %v1407
      %v1443 = vunpack.c.l.bf16 %v1408
      %v1444 = vunpack.c.h.bf16 %v1408
      %v1445 = vunpack.c.l.bf16 %v1409
      %v1446 = vunpack.c.h.bf16 %v1409
      %v1447 = vunpack.c.l.bf16 %v1410
      %v1448 = vunpack.c.h.bf16 %v1410
      %v1449 = vunpack.c.l.bf16 %v1411
      %v1450 = vunpack.c.h.bf16 %v1411
      %v1451 = vunpack.c.l.bf16 %v1412
      %v1452 = vunpack.c.h.bf16 %v1412
      %v1453 = vunpack.c.l.bf16 %v1413
      %v1454 = vunpack.c.h.bf16 %v1413
      %v1455 = vunpack.c.l.bf16 %v1414
      %v1456 = vunpack.c.h.bf16 %v1414
      %v1457 = vunpack.c.l.bf16 %v1415
      %v1458 = vunpack.c.h.bf16 %v1415
      %v1459 = vunpack.c.l.bf16 %v1416
      %v1460 = vunpack.c.h.bf16 %v1416
      %v1461 = vunpack.c.l.bf16 %v1417
      %v1462 = vunpack.c.h.bf16 %v1417
      %v1463 = vunpack.c.l.bf16 %v1418
      %v1464 = vunpack.c.h.bf16 %v1418
      %v1465 = vunpack.c.l.bf16 %v1419
      %v1466 = vunpack.c.h.bf16 %v1419
      %v1467 = vunpack.c.l.bf16 %v1420
      %v1468 = vunpack.c.h.bf16 %v1420
      %v1469 = vadd.f32 %v1204, %v1421
      %v1470 = vadd.f32 %v1262, %v1422
      %v1471 = vadd.f32 %v1206, %v1427
      %v1472 = vadd.f32 %v1264, %v1428
      %v1473 = vadd.f32 %v1209, %v1433
      %v1474 = vadd.f32 %v1267, %v1434
      %v1475 = vadd.f32 %v1211, %v1439
      %v1476 = vadd.f32 %v1269, %v1440
      %v1477 = vadd.f32 %v1214, %v1445
      %v1478 = vadd.f32 %v1272, %v1446
      %v1479 = vadd.f32 %v1216, %v1451
      %v1480 = vadd.f32 %v1274, %v1452
      %v1481 = vadd.f32 %v1219, %v1457
      %v1482 = vadd.f32 %v1277, %v1458
      %v1483 = vadd.f32 %v1221, %v1463
      %v1484 = vadd.f32 %v1279, %v1464
      %v1485 = vxor.u32 %v1469, 2147483648
      %v1486 = vxor.u32 %v1470, 2147483648
      %v1487 = vxor.u32 %v1471, 2147483648
      %v1488 = vxor.u32 %v1472, 2147483648
      %v1489 = vxor.u32 %v1473, 2147483648
      %v1490 = vxor.u32 %v1474, 2147483648
      %v1491 = vxor.u32 %v1475, 2147483648
      %v1492 = vxor.u32 %v1476, 2147483648
      %v1493 = vxor.u32 %v1477, 2147483648
      %v1494 = vxor.u32 %v1478, 2147483648
      %v1495 = vxor.u32 %v1479, 2147483648
      %v1496 = vxor.u32 %v1480, 2147483648
      %v1497 = vxor.u32 %v1481, 2147483648
      %v1498 = vxor.u32 %v1482, 2147483648
      %v1499 = vxor.u32 %v1483, 2147483648
      %v1500 = vxor.u32 %v1484, 2147483648
      %v1501 = vmul.f32 %v1485, 1.442695
      %v1502 = vpow.pop %v1501
      %v1503 = vmul.f32 %v1486, 1.442695
      %v1504 = vpow.pop %v1503
      %v1505 = vmul.f32 %v1487, 1.442695
      %v1506 = vpow.pop %v1505
      %v1507 = vmul.f32 %v1488, 1.442695
      %v1508 = vpow.pop %v1507
      %v1509 = vmul.f32 %v1489, 1.442695
      %v1510 = vpow.pop %v1509
      %v1511 = vmul.f32 %v1490, 1.442695
      %v1512 = vpow.pop %v1511
      %v1513 = vmul.f32 %v1491, 1.442695
      %v1514 = vpow.pop %v1513
      %v1515 = vmul.f32 %v1492, 1.442695
      %v1516 = vpow.pop %v1515
      %v1517 = vmul.f32 %v1493, 1.442695
      %v1518 = vpow.pop %v1517
      %v1519 = vmul.f32 %v1494, 1.442695
      %v1520 = vpow.pop %v1519
      %v1521 = vmul.f32 %v1495, 1.442695
      %v1522 = vpow.pop %v1521
      %v1523 = vmul.f32 %v1496, 1.442695
      %v1524 = vpow.pop %v1523
      %v1525 = vmul.f32 %v1497, 1.442695
      %v1526 = vpow.pop %v1525
      %v1527 = vmul.f32 %v1498, 1.442695
      %v1528 = vpow.pop %v1527
      %v1529 = vmul.f32 %v1499, 1.442695
      %v1530 = vpow.pop %v1529
      %v1531 = vmul.f32 %v1500, 1.442695
      %v1532 = vpow.pop %v1531
      %v1533 = vadd.f32 %v1502, 1.0
      %v1534 = vadd.f32 %v1504, 1.0
      %v1535 = vadd.f32 %v1506, 1.0
      %v1536 = vadd.f32 %v1508, 1.0
      %v1537 = vadd.f32 %v1510, 1.0
      %v1538 = vadd.f32 %v1512, 1.0
      %v1539 = vadd.f32 %v1514, 1.0
      %v1540 = vadd.f32 %v1516, 1.0
      %v1541 = vadd.f32 %v1518, 1.0
      %v1542 = vadd.f32 %v1520, 1.0
      %v1543 = vadd.f32 %v1522, 1.0
      %v1544 = vadd.f32 %v1524, 1.0
      %v1545 = vadd.f32 %v1526, 1.0
      %v1546 = vadd.f32 %v1528, 1.0
      %v1547 = vadd.f32 %v1530, 1.0
      %v1548 = vadd.f32 %v1532, 1.0
      %v1549 = vrcp.pop %v1533
      %v1550 = vmul.f32 %v1533, %v1549
      %v1551 = vsub.f32 1.0, %v1550
      %v1552 = vmul.f32 %v1549, %v1551
      %v1553 = vadd.f32 %v1549, %v1552
      %vm1554 = vweird.f32 %v1533
      %vm1555 = vweird.f32 %v1549
      %vm1556 = vmor %vm1554, %vm1555
      %v1557 = vsel %vm1556, %v1549, %v1553
      %v1558 = vand.u32 2147483647, %v1533
      %vm1559 = vcmp.eq.f32.partialorder %v1558, 8.507059e+37
      %v1560 = vand.u32 %v1533, 2147483648
      %v1561 = vor.u32 1.1754944e-38, %v1560
      %v1562 = vsel %vm1559, %v1561, %v1557
      %v1563 = vmul.f32 1.0, %v1562
      %v1564 = vrcp.pop %v1534
      %v1565 = vmul.f32 %v1534, %v1564
      %v1566 = vsub.f32 1.0, %v1565
      %v1567 = vmul.f32 %v1564, %v1566
      %v1568 = vadd.f32 %v1564, %v1567
      %vm1569 = vweird.f32 %v1534
      %vm1570 = vweird.f32 %v1564
      %vm1571 = vmor %vm1569, %vm1570
      %v1572 = vsel %vm1571, %v1564, %v1568
      %v1573 = vand.u32 2147483647, %v1534
      %vm1574 = vcmp.eq.f32.partialorder %v1573, 8.507059e+37
      %v1575 = vand.u32 %v1534, 2147483648
      %v1576 = vor.u32 1.1754944e-38, %v1575
      %v1577 = vsel %vm1574, %v1576, %v1572
      %v1578 = vmul.f32 1.0, %v1577
      %v1579 = vrcp.pop %v1535
      %v1580 = vmul.f32 %v1535, %v1579
      %v1581 = vsub.f32 1.0, %v1580
      %v1582 = vmul.f32 %v1579, %v1581
      %v1583 = vadd.f32 %v1579, %v1582
      %vm1584 = vweird.f32 %v1535
      %vm1585 = vweird.f32 %v1579
      %vm1586 = vmor %vm1584, %vm1585
      %v1587 = vsel %vm1586, %v1579, %v1583
      %v1588 = vand.u32 2147483647, %v1535
      %vm1589 = vcmp.eq.f32.partialorder %v1588, 8.507059e+37
      %v1590 = vand.u32 %v1535, 2147483648
      %v1591 = vor.u32 1.1754944e-38, %v1590
      %v1592 = vsel %vm1589, %v1591, %v1587
      %v1593 = vmul.f32 1.0, %v1592
      %v1594 = vrcp.pop %v1536
      %v1595 = vmul.f32 %v1536, %v1594
      %v1596 = vsub.f32 1.0, %v1595
      %v1597 = vmul.f32 %v1594, %v1596
      %v1598 = vadd.f32 %v1594, %v1597
      %vm1599 = vweird.f32 %v1536
      %vm1600 = vweird.f32 %v1594
      %vm1601 = vmor %vm1599, %vm1600
      %v1602 = vsel %vm1601, %v1594, %v1598
      %v1603 = vand.u32 2147483647, %v1536
      %vm1604 = vcmp.eq.f32.partialorder %v1603, 8.507059e+37
      %v1605 = vand.u32 %v1536, 2147483648
      %v1606 = vor.u32 1.1754944e-38, %v1605
      %v1607 = vsel %vm1604, %v1606, %v1602
      %v1608 = vmul.f32 1.0, %v1607
      %v1609 = vrcp.pop %v1537
      %v1610 = vmul.f32 %v1537, %v1609
      %v1611 = vsub.f32 1.0, %v1610
      %v1612 = vmul.f32 %v1609, %v1611
      %v1613 = vadd.f32 %v1609, %v1612
      %vm1614 = vweird.f32 %v1537
      %vm1615 = vweird.f32 %v1609
      %vm1616 = vmor %vm1614, %vm1615
      %v1617 = vsel %vm1616, %v1609, %v1613
      %v1618 = vand.u32 2147483647, %v1537
      %vm1619 = vcmp.eq.f32.partialorder %v1618, 8.507059e+37
      %v1620 = vand.u32 %v1537, 2147483648
      %v1621 = vor.u32 1.1754944e-38, %v1620
      %v1622 = vsel %vm1619, %v1621, %v1617
      %v1623 = vmul.f32 1.0, %v1622
      %v1624 = vrcp.pop %v1538
      %v1625 = vmul.f32 %v1538, %v1624
      %v1626 = vsub.f32 1.0, %v1625
      %v1627 = vmul.f32 %v1624, %v1626
      %v1628 = vadd.f32 %v1624, %v1627
      %vm1629 = vweird.f32 %v1538
      %vm1630 = vweird.f32 %v1624
      %vm1631 = vmor %vm1629, %vm1630
      %v1632 = vsel %vm1631, %v1624, %v1628
      %v1633 = vand.u32 2147483647, %v1538
      %vm1634 = vcmp.eq.f32.partialorder %v1633, 8.507059e+37
      %v1635 = vand.u32 %v1538, 2147483648
      %v1636 = vor.u32 1.1754944e-38, %v1635
      %v1637 = vsel %vm1634, %v1636, %v1632
      %v1638 = vmul.f32 1.0, %v1637
      %v1639 = vrcp.pop %v1539
      %v1640 = vmul.f32 %v1539, %v1639
      %v1641 = vsub.f32 1.0, %v1640
      %v1642 = vmul.f32 %v1639, %v1641
      %v1643 = vadd.f32 %v1639, %v1642
      %vm1644 = vweird.f32 %v1539
      %vm1645 = vweird.f32 %v1639
      %vm1646 = vmor %vm1644, %vm1645
      %v1647 = vsel %vm1646, %v1639, %v1643
      %v1648 = vand.u32 2147483647, %v1539
      %vm1649 = vcmp.eq.f32.partialorder %v1648, 8.507059e+37
      %v1650 = vand.u32 %v1539, 2147483648
      %v1651 = vor.u32 1.1754944e-38, %v1650
      %v1652 = vsel %vm1649, %v1651, %v1647
      %v1653 = vmul.f32 1.0, %v1652
      %v1654 = vrcp.pop %v1540
      %v1655 = vmul.f32 %v1540, %v1654
      %v1656 = vsub.f32 1.0, %v1655
      %v1657 = vmul.f32 %v1654, %v1656
      %v1658 = vadd.f32 %v1654, %v1657
      %vm1659 = vweird.f32 %v1540
      %vm1660 = vweird.f32 %v1654
      %vm1661 = vmor %vm1659, %vm1660
      %v1662 = vsel %vm1661, %v1654, %v1658
      %v1663 = vand.u32 2147483647, %v1540
      %vm1664 = vcmp.eq.f32.partialorder %v1663, 8.507059e+37
      %v1665 = vand.u32 %v1540, 2147483648
      %v1666 = vor.u32 1.1754944e-38, %v1665
      %v1667 = vsel %vm1664, %v1666, %v1662
      %v1668 = vmul.f32 1.0, %v1667
      %v1669 = vrcp.pop %v1541
      %v1670 = vmul.f32 %v1541, %v1669
      %v1671 = vsub.f32 1.0, %v1670
      %v1672 = vmul.f32 %v1669, %v1671
      %v1673 = vadd.f32 %v1669, %v1672
      %vm1674 = vweird.f32 %v1541
      %vm1675 = vweird.f32 %v1669
      %vm1676 = vmor %vm1674, %vm1675
      %v1677 = vsel %vm1676, %v1669, %v1673
      %v1678 = vand.u32 2147483647, %v1541
      %vm1679 = vcmp.eq.f32.partialorder %v1678, 8.507059e+37
      %v1680 = vand.u32 %v1541, 2147483648
      %v1681 = vor.u32 1.1754944e-38, %v1680
      %v1682 = vsel %vm1679, %v1681, %v1677
      %v1683 = vmul.f32 1.0, %v1682
      %v1684 = vrcp.pop %v1542
      %v1685 = vmul.f32 %v1542, %v1684
      %v1686 = vsub.f32 1.0, %v1685
      %v1687 = vmul.f32 %v1684, %v1686
      %v1688 = vadd.f32 %v1684, %v1687
      %vm1689 = vweird.f32 %v1542
      %vm1690 = vweird.f32 %v1684
      %vm1691 = vmor %vm1689, %vm1690
      %v1692 = vsel %vm1691, %v1684, %v1688
      %v1693 = vand.u32 2147483647, %v1542
      %vm1694 = vcmp.eq.f32.partialorder %v1693, 8.507059e+37
      %v1695 = vand.u32 %v1542, 2147483648
      %v1696 = vor.u32 1.1754944e-38, %v1695
      %v1697 = vsel %vm1694, %v1696, %v1692
      %v1698 = vmul.f32 1.0, %v1697
      %v1699 = vrcp.pop %v1543
      %v1700 = vmul.f32 %v1543, %v1699
      %v1701 = vsub.f32 1.0, %v1700
      %v1702 = vmul.f32 %v1699, %v1701
      %v1703 = vadd.f32 %v1699, %v1702
      %vm1704 = vweird.f32 %v1543
      %vm1705 = vweird.f32 %v1699
      %vm1706 = vmor %vm1704, %vm1705
      %v1707 = vsel %vm1706, %v1699, %v1703
      %v1708 = vand.u32 2147483647, %v1543
      %vm1709 = vcmp.eq.f32.partialorder %v1708, 8.507059e+37
      %v1710 = vand.u32 %v1543, 2147483648
      %v1711 = vor.u32 1.1754944e-38, %v1710
      %v1712 = vsel %vm1709, %v1711, %v1707
      %v1713 = vmul.f32 1.0, %v1712
      %v1714 = vrcp.pop %v1544
      %v1715 = vmul.f32 %v1544, %v1714
      %v1716 = vsub.f32 1.0, %v1715
      %v1717 = vmul.f32 %v1714, %v1716
      %v1718 = vadd.f32 %v1714, %v1717
      %vm1719 = vweird.f32 %v1544
      %vm1720 = vweird.f32 %v1714
      %vm1721 = vmor %vm1719, %vm1720
      %v1722 = vsel %vm1721, %v1714, %v1718
      %v1723 = vand.u32 2147483647, %v1544
      %vm1724 = vcmp.eq.f32.partialorder %v1723, 8.507059e+37
      %v1725 = vand.u32 %v1544, 2147483648
      %v1726 = vor.u32 1.1754944e-38, %v1725
      %v1727 = vsel %vm1724, %v1726, %v1722
      %v1728 = vmul.f32 1.0, %v1727
      %v1729 = vrcp.pop %v1545
      %v1730 = vmul.f32 %v1545, %v1729
      %v1731 = vsub.f32 1.0, %v1730
      %v1732 = vmul.f32 %v1729, %v1731
      %v1733 = vadd.f32 %v1729, %v1732
      %vm1734 = vweird.f32 %v1545
      %vm1735 = vweird.f32 %v1729
      %vm1736 = vmor %vm1734, %vm1735
      %v1737 = vsel %vm1736, %v1729, %v1733
      %v1738 = vand.u32 2147483647, %v1545
      %vm1739 = vcmp.eq.f32.partialorder %v1738, 8.507059e+37
      %v1740 = vand.u32 %v1545, 2147483648
      %v1741 = vor.u32 1.1754944e-38, %v1740
      %v1742 = vsel %vm1739, %v1741, %v1737
      %v1743 = vmul.f32 1.0, %v1742
      %v1744 = vrcp.pop %v1546
      %v1745 = vmul.f32 %v1546, %v1744
      %v1746 = vsub.f32 1.0, %v1745
      %v1747 = vmul.f32 %v1744, %v1746
      %v1748 = vadd.f32 %v1744, %v1747
      %vm1749 = vweird.f32 %v1546
      %vm1750 = vweird.f32 %v1744
      %vm1751 = vmor %vm1749, %vm1750
      %v1752 = vsel %vm1751, %v1744, %v1748
      %v1753 = vand.u32 2147483647, %v1546
      %vm1754 = vcmp.eq.f32.partialorder %v1753, 8.507059e+37
      %v1755 = vand.u32 %v1546, 2147483648
      %v1756 = vor.u32 1.1754944e-38, %v1755
      %v1757 = vsel %vm1754, %v1756, %v1752
      %v1758 = vmul.f32 1.0, %v1757
      %v1759 = vrcp.pop %v1547
      %v1760 = vmul.f32 %v1547, %v1759
      %v1761 = vsub.f32 1.0, %v1760
      %v1762 = vmul.f32 %v1759, %v1761
      %v1763 = vadd.f32 %v1759, %v1762
      %vm1764 = vweird.f32 %v1547
      %vm1765 = vweird.f32 %v1759
      %vm1766 = vmor %vm1764, %vm1765
      %v1767 = vsel %vm1766, %v1759, %v1763
      %v1768 = vand.u32 2147483647, %v1547
      %vm1769 = vcmp.eq.f32.partialorder %v1768, 8.507059e+37
      %v1770 = vand.u32 %v1547, 2147483648
      %v1771 = vor.u32 1.1754944e-38, %v1770
      %v1772 = vsel %vm1769, %v1771, %v1767
      %v1773 = vmul.f32 1.0, %v1772
      %v1774 = vrcp.pop %v1548
      %v1775 = vmul.f32 %v1548, %v1774
      %v1776 = vsub.f32 1.0, %v1775
      %v1777 = vmul.f32 %v1774, %v1776
      %v1778 = vadd.f32 %v1774, %v1777
      %vm1779 = vweird.f32 %v1548
      %vm1780 = vweird.f32 %v1774
      %vm1781 = vmor %vm1779, %vm1780
      %v1782 = vsel %vm1781, %v1774, %v1778
      %v1783 = vand.u32 2147483647, %v1548
      %vm1784 = vcmp.eq.f32.partialorder %v1783, 8.507059e+37
      %v1785 = vand.u32 %v1548, 2147483648
      %v1786 = vor.u32 1.1754944e-38, %v1785
      %v1787 = vsel %vm1784, %v1786, %v1782
      %v1788 = vmul.f32 1.0, %v1787
      %v1789 = vadd.f32 %v1320, %v1423
      %v1790 = vadd.f32 %v1378, %v1424
      %v1791 = vadd.f32 %v1322, %v1429
      %v1792 = vadd.f32 %v1380, %v1430
      %v1793 = vadd.f32 %v1325, %v1435
      %v1794 = vadd.f32 %v1383, %v1436
      %v1795 = vadd.f32 %v1327, %v1441
      %v1796 = vadd.f32 %v1385, %v1442
      %v1797 = vadd.f32 %v1330, %v1447
      %v1798 = vadd.f32 %v1388, %v1448
      %v1799 = vadd.f32 %v1332, %v1453
      %v1800 = vadd.f32 %v1390, %v1454
      %v1801 = vadd.f32 %v1335, %v1459
      %v1802 = vadd.f32 %v1393, %v1460
      %v1803 = vadd.f32 %v1337, %v1465
      %v1804 = vadd.f32 %v1395, %v1466
      %v1805 = vxor.u32 %v1789, 2147483648
      %v1806 = vxor.u32 %v1790, 2147483648
      %v1807 = vxor.u32 %v1791, 2147483648
      %v1808 = vxor.u32 %v1792, 2147483648
      %v1809 = vxor.u32 %v1793, 2147483648
      %v1810 = vxor.u32 %v1794, 2147483648
      %v1811 = vxor.u32 %v1795, 2147483648
      %v1812 = vxor.u32 %v1796, 2147483648
      %v1813 = vxor.u32 %v1797, 2147483648
      %v1814 = vxor.u32 %v1798, 2147483648
      %v1815 = vxor.u32 %v1799, 2147483648
      %v1816 = vxor.u32 %v1800, 2147483648
      %v1817 = vxor.u32 %v1801, 2147483648
      %v1818 = vxor.u32 %v1802, 2147483648
      %v1819 = vxor.u32 %v1803, 2147483648
      %v1820 = vxor.u32 %v1804, 2147483648
      %v1821 = vmul.f32 %v1805, 1.442695
      %v1822 = vpow.pop %v1821
      %v1823 = vmul.f32 %v1806, 1.442695
      %v1824 = vpow.pop %v1823
      %v1825 = vmul.f32 %v1807, 1.442695
      %v1826 = vpow.pop %v1825
      %v1827 = vmul.f32 %v1808, 1.442695
      %v1828 = vpow.pop %v1827
      %v1829 = vmul.f32 %v1809, 1.442695
      %v1830 = vpow.pop %v1829
      %v1831 = vmul.f32 %v1810, 1.442695
      %v1832 = vpow.pop %v1831
      %v1833 = vmul.f32 %v1811, 1.442695
      %v1834 = vpow.pop %v1833
      %v1835 = vmul.f32 %v1812, 1.442695
      %v1836 = vpow.pop %v1835
      %v1837 = vmul.f32 %v1813, 1.442695
      %v1838 = vpow.pop %v1837
      %v1839 = vmul.f32 %v1814, 1.442695
      %v1840 = vpow.pop %v1839
      %v1841 = vmul.f32 %v1815, 1.442695
      %v1842 = vpow.pop %v1841
      %v1843 = vmul.f32 %v1816, 1.442695
      %v1844 = vpow.pop %v1843
      %v1845 = vmul.f32 %v1817, 1.442695
      %v1846 = vpow.pop %v1845
      %v1847 = vmul.f32 %v1818, 1.442695
      %v1848 = vpow.pop %v1847
      %v1849 = vmul.f32 %v1819, 1.442695
      %v1850 = vpow.pop %v1849
      %v1851 = vmul.f32 %v1820, 1.442695
      %v1852 = vpow.pop %v1851
      %v1853 = vadd.f32 %v1822, 1.0
      %v1854 = vadd.f32 %v1824, 1.0
      %v1855 = vadd.f32 %v1826, 1.0
      %v1856 = vadd.f32 %v1828, 1.0
      %v1857 = vadd.f32 %v1830, 1.0
      %v1858 = vadd.f32 %v1832, 1.0
      %v1859 = vadd.f32 %v1834, 1.0
      %v1860 = vadd.f32 %v1836, 1.0
      %v1861 = vadd.f32 %v1838, 1.0
      %v1862 = vadd.f32 %v1840, 1.0
      %v1863 = vadd.f32 %v1842, 1.0
      %v1864 = vadd.f32 %v1844, 1.0
      %v1865 = vadd.f32 %v1846, 1.0
      %v1866 = vadd.f32 %v1848, 1.0
      %v1867 = vadd.f32 %v1850, 1.0
      %v1868 = vadd.f32 %v1852, 1.0
      %v1869 = vrcp.pop %v1853
      %v1870 = vmul.f32 %v1853, %v1869
      %v1871 = vsub.f32 1.0, %v1870
      %v1872 = vmul.f32 %v1869, %v1871
      %v1873 = vadd.f32 %v1869, %v1872
      %vm1874 = vweird.f32 %v1853
      %vm1875 = vweird.f32 %v1869
      %vm1876 = vmor %vm1874, %vm1875
      %v1877 = vsel %vm1876, %v1869, %v1873
      %v1878 = vand.u32 2147483647, %v1853
      %vm1879 = vcmp.eq.f32.partialorder %v1878, 8.507059e+37
      %v1880 = vand.u32 %v1853, 2147483648
      %v1881 = vor.u32 1.1754944e-38, %v1880
      %v1882 = vsel %vm1879, %v1881, %v1877
      %v1883 = vmul.f32 1.0, %v1882
      %v1884 = vrcp.pop %v1854
      %v1885 = vmul.f32 %v1854, %v1884
      %v1886 = vsub.f32 1.0, %v1885
      %v1887 = vmul.f32 %v1884, %v1886
      %v1888 = vadd.f32 %v1884, %v1887
      %vm1889 = vweird.f32 %v1854
      %vm1890 = vweird.f32 %v1884
      %vm1891 = vmor %vm1889, %vm1890
      %v1892 = vsel %vm1891, %v1884, %v1888
      %v1893 = vand.u32 2147483647, %v1854
      %vm1894 = vcmp.eq.f32.partialorder %v1893, 8.507059e+37
      %v1895 = vand.u32 %v1854, 2147483648
      %v1896 = vor.u32 1.1754944e-38, %v1895
      %v1897 = vsel %vm1894, %v1896, %v1892
      %v1898 = vmul.f32 1.0, %v1897
      %v1899 = vrcp.pop %v1855
      %v1900 = vmul.f32 %v1855, %v1899
      %v1901 = vsub.f32 1.0, %v1900
      %v1902 = vmul.f32 %v1899, %v1901
      %v1903 = vadd.f32 %v1899, %v1902
      %vm1904 = vweird.f32 %v1855
      %vm1905 = vweird.f32 %v1899
      %vm1906 = vmor %vm1904, %vm1905
      %v1907 = vsel %vm1906, %v1899, %v1903
      %v1908 = vand.u32 2147483647, %v1855
      %vm1909 = vcmp.eq.f32.partialorder %v1908, 8.507059e+37
      %v1910 = vand.u32 %v1855, 2147483648
      %v1911 = vor.u32 1.1754944e-38, %v1910
      %v1912 = vsel %vm1909, %v1911, %v1907
      %v1913 = vmul.f32 1.0, %v1912
      %v1914 = vrcp.pop %v1856
      %v1915 = vmul.f32 %v1856, %v1914
      %v1916 = vsub.f32 1.0, %v1915
      %v1917 = vmul.f32 %v1914, %v1916
      %v1918 = vadd.f32 %v1914, %v1917
      %vm1919 = vweird.f32 %v1856
      %vm1920 = vweird.f32 %v1914
      %vm1921 = vmor %vm1919, %vm1920
      %v1922 = vsel %vm1921, %v1914, %v1918
      %v1923 = vand.u32 2147483647, %v1856
      %vm1924 = vcmp.eq.f32.partialorder %v1923, 8.507059e+37
      %v1925 = vand.u32 %v1856, 2147483648
      %v1926 = vor.u32 1.1754944e-38, %v1925
      %v1927 = vsel %vm1924, %v1926, %v1922
      %v1928 = vmul.f32 1.0, %v1927
      %v1929 = vrcp.pop %v1857
      %v1930 = vmul.f32 %v1857, %v1929
      %v1931 = vsub.f32 1.0, %v1930
      %v1932 = vmul.f32 %v1929, %v1931
      %v1933 = vadd.f32 %v1929, %v1932
      %vm1934 = vweird.f32 %v1857
      %vm1935 = vweird.f32 %v1929
      %vm1936 = vmor %vm1934, %vm1935
      %v1937 = vsel %vm1936, %v1929, %v1933
      %v1938 = vand.u32 2147483647, %v1857
      %vm1939 = vcmp.eq.f32.partialorder %v1938, 8.507059e+37
      %v1940 = vand.u32 %v1857, 2147483648
      %v1941 = vor.u32 1.1754944e-38, %v1940
      %v1942 = vsel %vm1939, %v1941, %v1937
      %v1943 = vmul.f32 1.0, %v1942
      %v1944 = vrcp.pop %v1858
      %v1945 = vmul.f32 %v1858, %v1944
      %v1946 = vsub.f32 1.0, %v1945
      %v1947 = vmul.f32 %v1944, %v1946
      %v1948 = vadd.f32 %v1944, %v1947
      %vm1949 = vweird.f32 %v1858
      %vm1950 = vweird.f32 %v1944
      %vm1951 = vmor %vm1949, %vm1950
      %v1952 = vsel %vm1951, %v1944, %v1948
      %v1953 = vand.u32 2147483647, %v1858
      %vm1954 = vcmp.eq.f32.partialorder %v1953, 8.507059e+37
      %v1955 = vand.u32 %v1858, 2147483648
      %v1956 = vor.u32 1.1754944e-38, %v1955
      %v1957 = vsel %vm1954, %v1956, %v1952
      %v1958 = vmul.f32 1.0, %v1957
      %v1959 = vrcp.pop %v1859
      %v1960 = vmul.f32 %v1859, %v1959
      %v1961 = vsub.f32 1.0, %v1960
      %v1962 = vmul.f32 %v1959, %v1961
      %v1963 = vadd.f32 %v1959, %v1962
      %vm1964 = vweird.f32 %v1859
      %vm1965 = vweird.f32 %v1959
      %vm1966 = vmor %vm1964, %vm1965
      %v1967 = vsel %vm1966, %v1959, %v1963
      %v1968 = vand.u32 2147483647, %v1859
      %vm1969 = vcmp.eq.f32.partialorder %v1968, 8.507059e+37
      %v1970 = vand.u32 %v1859, 2147483648
      %v1971 = vor.u32 1.1754944e-38, %v1970
      %v1972 = vsel %vm1969, %v1971, %v1967
      %v1973 = vmul.f32 1.0, %v1972
      %v1974 = vrcp.pop %v1860
      %v1975 = vmul.f32 %v1860, %v1974
      %v1976 = vsub.f32 1.0, %v1975
      %v1977 = vmul.f32 %v1974, %v1976
      %v1978 = vadd.f32 %v1974, %v1977
      %vm1979 = vweird.f32 %v1860
      %vm1980 = vweird.f32 %v1974
      %vm1981 = vmor %vm1979, %vm1980
      %v1982 = vsel %vm1981, %v1974, %v1978
      %v1983 = vand.u32 2147483647, %v1860
      %vm1984 = vcmp.eq.f32.partialorder %v1983, 8.507059e+37
      %v1985 = vand.u32 %v1860, 2147483648
      %v1986 = vor.u32 1.1754944e-38, %v1985
      %v1987 = vsel %vm1984, %v1986, %v1982
      %v1988 = vmul.f32 1.0, %v1987
      %v1989 = vrcp.pop %v1861
      %v1990 = vmul.f32 %v1861, %v1989
      %v1991 = vsub.f32 1.0, %v1990
      %v1992 = vmul.f32 %v1989, %v1991
      %v1993 = vadd.f32 %v1989, %v1992
      %vm1994 = vweird.f32 %v1861
      %vm1995 = vweird.f32 %v1989
      %vm1996 = vmor %vm1994, %vm1995
      %v1997 = vsel %vm1996, %v1989, %v1993
      %v1998 = vand.u32 2147483647, %v1861
      %vm1999 = vcmp.eq.f32.partialorder %v1998, 8.507059e+37
      %v2000 = vand.u32 %v1861, 2147483648
      %v2001 = vor.u32 1.1754944e-38, %v2000
      %v2002 = vsel %vm1999, %v2001, %v1997
      %v2003 = vmul.f32 1.0, %v2002
      %v2004 = vrcp.pop %v1862
      %v2005 = vmul.f32 %v1862, %v2004
      %v2006 = vsub.f32 1.0, %v2005
      %v2007 = vmul.f32 %v2004, %v2006
      %v2008 = vadd.f32 %v2004, %v2007
      %vm2009 = vweird.f32 %v1862
      %vm2010 = vweird.f32 %v2004
      %vm2011 = vmor %vm2009, %vm2010
      %v2012 = vsel %vm2011, %v2004, %v2008
      %v2013 = vand.u32 2147483647, %v1862
      %vm2014 = vcmp.eq.f32.partialorder %v2013, 8.507059e+37
      %v2015 = vand.u32 %v1862, 2147483648
      %v2016 = vor.u32 1.1754944e-38, %v2015
      %v2017 = vsel %vm2014, %v2016, %v2012
      %v2018 = vmul.f32 1.0, %v2017
      %v2019 = vrcp.pop %v1863
      %v2020 = vmul.f32 %v1863, %v2019
      %v2021 = vsub.f32 1.0, %v2020
      %v2022 = vmul.f32 %v2019, %v2021
      %v2023 = vadd.f32 %v2019, %v2022
      %vm2024 = vweird.f32 %v1863
      %vm2025 = vweird.f32 %v2019
      %vm2026 = vmor %vm2024, %vm2025
      %v2027 = vsel %vm2026, %v2019, %v2023
      %v2028 = vand.u32 2147483647, %v1863
      %vm2029 = vcmp.eq.f32.partialorder %v2028, 8.507059e+37
      %v2030 = vand.u32 %v1863, 2147483648
      %v2031 = vor.u32 1.1754944e-38, %v2030
      %v2032 = vsel %vm2029, %v2031, %v2027
      %v2033 = vmul.f32 1.0, %v2032
      %v2034 = vrcp.pop %v1864
      %v2035 = vmul.f32 %v1864, %v2034
      %v2036 = vsub.f32 1.0, %v2035
      %v2037 = vmul.f32 %v2034, %v2036
      %v2038 = vadd.f32 %v2034, %v2037
      %vm2039 = vweird.f32 %v1864
      %vm2040 = vweird.f32 %v2034
      %vm2041 = vmor %vm2039, %vm2040
      %v2042 = vsel %vm2041, %v2034, %v2038
      %v2043 = vand.u32 2147483647, %v1864
      %vm2044 = vcmp.eq.f32.partialorder %v2043, 8.507059e+37
      %v2045 = vand.u32 %v1864, 2147483648
      %v2046 = vor.u32 1.1754944e-38, %v2045
      %v2047 = vsel %vm2044, %v2046, %v2042
      %v2048 = vmul.f32 1.0, %v2047
      %v2049 = vrcp.pop %v1865
      %v2050 = vmul.f32 %v1865, %v2049
      %v2051 = vsub.f32 1.0, %v2050
      %v2052 = vmul.f32 %v2049, %v2051
      %v2053 = vadd.f32 %v2049, %v2052
      %vm2054 = vweird.f32 %v1865
      %vm2055 = vweird.f32 %v2049
      %vm2056 = vmor %vm2054, %vm2055
      %v2057 = vsel %vm2056, %v2049, %v2053
      %v2058 = vand.u32 2147483647, %v1865
      %vm2059 = vcmp.eq.f32.partialorder %v2058, 8.507059e+37
      %v2060 = vand.u32 %v1865, 2147483648
      %v2061 = vor.u32 1.1754944e-38, %v2060
      %v2062 = vsel %vm2059, %v2061, %v2057
      %v2063 = vmul.f32 1.0, %v2062
      %v2064 = vrcp.pop %v1866
      %v2065 = vmul.f32 %v1866, %v2064
      %v2066 = vsub.f32 1.0, %v2065
      %v2067 = vmul.f32 %v2064, %v2066
      %v2068 = vadd.f32 %v2064, %v2067
      %vm2069 = vweird.f32 %v1866
      %vm2070 = vweird.f32 %v2064
      %vm2071 = vmor %vm2069, %vm2070
      %v2072 = vsel %vm2071, %v2064, %v2068
      %v2073 = vand.u32 2147483647, %v1866
      %vm2074 = vcmp.eq.f32.partialorder %v2073, 8.507059e+37
      %v2075 = vand.u32 %v1866, 2147483648
      %v2076 = vor.u32 1.1754944e-38, %v2075
      %v2077 = vsel %vm2074, %v2076, %v2072
      %v2078 = vmul.f32 1.0, %v2077
      %v2079 = vrcp.pop %v1867
      %v2080 = vmul.f32 %v1867, %v2079
      %v2081 = vsub.f32 1.0, %v2080
      %v2082 = vmul.f32 %v2079, %v2081
      %v2083 = vadd.f32 %v2079, %v2082
      %vm2084 = vweird.f32 %v1867
      %vm2085 = vweird.f32 %v2079
      %vm2086 = vmor %vm2084, %vm2085
      %v2087 = vsel %vm2086, %v2079, %v2083
      %v2088 = vand.u32 2147483647, %v1867
      %vm2089 = vcmp.eq.f32.partialorder %v2088, 8.507059e+37
      %v2090 = vand.u32 %v1867, 2147483648
      %v2091 = vor.u32 1.1754944e-38, %v2090
      %v2092 = vsel %vm2089, %v2091, %v2087
      %v2093 = vmul.f32 1.0, %v2092
      %v2094 = vrcp.pop %v1868
      %v2095 = vmul.f32 %v1868, %v2094
      %v2096 = vsub.f32 1.0, %v2095
      %v2097 = vmul.f32 %v2094, %v2096
      %v2098 = vadd.f32 %v2094, %v2097
      %vm2099 = vweird.f32 %v1868
      %vm2100 = vweird.f32 %v2094
      %vm2101 = vmor %vm2099, %vm2100
      %v2102 = vsel %vm2101, %v2094, %v2098
      %v2103 = vand.u32 2147483647, %v1868
      %vm2104 = vcmp.eq.f32.partialorder %v2103, 8.507059e+37
      %v2105 = vand.u32 %v1868, 2147483648
      %v2106 = vor.u32 1.1754944e-38, %v2105
      %v2107 = vsel %vm2104, %v2106, %v2102
      %v2108 = vmul.f32 1.0, %v2107
      %v2109 = vmul.f32 %v1883, %v757
      %v2110 = vmul.f32 %v1898, %v758
      %v2111 = vmul.f32 %v1913, %v759
      %v2112 = vmul.f32 %v1928, %v760
      %v2113 = vmul.f32 %v1943, %v761
      %v2114 = vmul.f32 %v1958, %v762
      %v2115 = vmul.f32 %v1973, %v763
      %v2116 = vmul.f32 %v1988, %v764
      %v2117 = vmul.f32 %v2003, %v765
      %v2118 = vmul.f32 %v2018, %v766
      %v2119 = vmul.f32 %v2033, %v767
      %v2120 = vmul.f32 %v2048, %v768
      %v2121 = vmul.f32 %v2063, %v769
      %v2122 = vmul.f32 %v2078, %v770
      %v2123 = vmul.f32 %v2093, %v771
      %v2124 = vmul.f32 %v2108, %v772
      %v2125 = vpack.c.bf16 %v2111, %v2109
      %v2126 = vpack.c.bf16 %v2112, %v2110
      %v2127 = vpack.c.bf16 %v2115, %v2113
      %v2128 = vpack.c.bf16 %v2116, %v2114
      %v2129 = vpack.c.bf16 %v2119, %v2117
      %v2130 = vpack.c.bf16 %v2120, %v2118
      %v2131 = vpack.c.bf16 %v2123, %v2121
      %v2132 = vpack.c.bf16 %v2124, %v2122
      %v2133 = vld [vmem:[%s5] sm:$0xff]
      %v2134 = vld [vmem:[%s5 + $0x8] sm:$0xff]
      %v2135 = vld [vmem:[%s5 + $0x10] sm:$0xff]
      %v2136 = vld [vmem:[%s5 + $0x18] sm:$0xff]
      %v2137 = vld [vmem:[%s5 + $0x20] sm:$0xff]
      %v2138 = vld [vmem:[%s5 + $0x28] sm:$0xff]
      %v2139 = vld [vmem:[%s5 + $0x30] sm:$0xff]
      %v2140 = vld [vmem:[%s5 + $0x38] sm:$0xff]
      %v2141 = vld [vmem:[%s5 + $0x40] sm:$0xff]
      %v2142 = vld [vmem:[%s5 + $0x48] sm:$0xff]
      %v2143 = vld [vmem:[%s5 + $0x50] sm:$0xff]
      %v2144 = vld [vmem:[%s5 + $0x58] sm:$0xff]
      %v2145 = vld [vmem:[%s5 + $0x60] sm:$0xff]
      %v2146 = vld [vmem:[%s5 + $0x68] sm:$0xff]
      %v2147 = vld [vmem:[%s5 + $0x70] sm:$0xff]
      %v2148 = vld [vmem:[%s5 + $0x78] sm:$0xff]
      %v2149 = vld [vmem:[%s5 + $0x80] sm:$0xff]
      %v2150 = vld [vmem:[%s5 + $0x88] sm:$0xff]
      %v2151 = vld [vmem:[%s5 + $0x90] sm:$0xff]
      %v2152 = vld [vmem:[%s5 + $0x98] sm:$0xff]
      %v2153 = vld [vmem:[%s5 + $0xa0] sm:$0xff]
      %v2154 = vld [vmem:[%s5 + $0xa8] sm:$0xff]
      %v2155 = vld [vmem:[%s5 + $0xb0] sm:$0xff]
      %v2156 = vld [vmem:[%s5 + $0xb8] sm:$0xff]
      %v2157 = vld [vmem:[%s5 + $0xc0] sm:$0xff]
      %v2158 = vld [vmem:[%s5 + $0xc8] sm:$0xff]
      %v2159 = vld [vmem:[%s5 + $0xd0] sm:$0xff]
      %v2160 = vld [vmem:[%s5 + $0xd8] sm:$0xff]
      %v2161 = vld [vmem:[%s5 + $0xe0] sm:$0xff]
      %v2162 = vld [vmem:[%s5 + $0xe8] sm:$0xff]
      %v2163 = vld [vmem:[%s5 + $0xf0] sm:$0xff]
      %v2164 = vld [vmem:[%s5 + $0xf8] sm:$0xff]
      %v2197 = vunpack.c.l.b16 %v2133
      %v2198 = vunpack.c.h.b16 %v2133
      %v2199 = vunpack.c.l.b16 %v2134
      %v2200 = vunpack.c.h.b16 %v2134
      %v2201 = vunpack.c.l.b16 %v2135
      %v2202 = vunpack.c.h.b16 %v2135
      %v2203 = vunpack.c.l.b16 %v2136
      %v2204 = vunpack.c.h.b16 %v2136
      %v2205 = vunpack.c.l.b16 %v2137
      %v2206 = vunpack.c.h.b16 %v2137
      %v2207 = vunpack.c.l.b16 %v2138
      %v2208 = vunpack.c.h.b16 %v2138
      %v2209 = vunpack.c.l.b16 %v2139
      %v2210 = vunpack.c.h.b16 %v2139
      %v2211 = vunpack.c.l.b16 %v2140
      %v2212 = vunpack.c.h.b16 %v2140
      %v2213 = vunpack.c.l.b16 %v2141
      %v2214 = vunpack.c.h.b16 %v2141
      %v2215 = vunpack.c.l.b16 %v2142
      %v2216 = vunpack.c.h.b16 %v2142
      %v2217 = vunpack.c.l.b16 %v2143
      %v2218 = vunpack.c.h.b16 %v2143
      %v2219 = vunpack.c.l.b16 %v2144
      %v2220 = vunpack.c.h.b16 %v2144
      %v2221 = vunpack.c.l.b16 %v2145
      %v2222 = vunpack.c.h.b16 %v2145
      %v2223 = vunpack.c.l.b16 %v2146
      %v2224 = vunpack.c.h.b16 %v2146
      %v2225 = vunpack.c.l.b16 %v2147
      %v2226 = vunpack.c.h.b16 %v2147
      %v2227 = vunpack.c.l.b16 %v2148
      %v2228 = vunpack.c.h.b16 %v2148
      %v2229 = vunpack.c.l.b16 %v2149
      %v2230 = vunpack.c.h.b16 %v2149
      %v2231 = vunpack.c.l.b16 %v2150
      %v2232 = vunpack.c.h.b16 %v2150
      %v2233 = vunpack.c.l.b16 %v2151
      %v2234 = vunpack.c.h.b16 %v2151
      %v2235 = vunpack.c.l.b16 %v2152
      %v2236 = vunpack.c.h.b16 %v2152
      %v2237 = vunpack.c.l.b16 %v2153
      %v2238 = vunpack.c.h.b16 %v2153
      %v2239 = vunpack.c.l.b16 %v2154
      %v2240 = vunpack.c.h.b16 %v2154
      %v2241 = vunpack.c.l.b16 %v2155
      %v2242 = vunpack.c.h.b16 %v2155
      %v2243 = vunpack.c.l.b16 %v2156
      %v2244 = vunpack.c.h.b16 %v2156
      %v2245 = vunpack.c.l.b16 %v2157
      %v2246 = vunpack.c.h.b16 %v2157
      %v2247 = vunpack.c.l.b16 %v2158
      %v2248 = vunpack.c.h.b16 %v2158
      %v2249 = vunpack.c.l.b16 %v2159
      %v2250 = vunpack.c.h.b16 %v2159
      %v2251 = vunpack.c.l.b16 %v2160
      %v2252 = vunpack.c.h.b16 %v2160
      %v2253 = vunpack.c.l.b16 %v2161
      %v2254 = vunpack.c.h.b16 %v2161
      %v2255 = vunpack.c.l.b16 %v2162
      %v2256 = vunpack.c.h.b16 %v2162
      %v2257 = vunpack.c.l.b16 %v2163
      %v2258 = vunpack.c.h.b16 %v2163
      %v2259 = vunpack.c.l.b16 %v2164
      %v2260 = vunpack.c.h.b16 %v2164
      %v2261 = vpack.c.b16 %v2199, %v2197
      %v2262 = vpack.c.b16 %v2200, %v2198
      %v2263 = vpack.c.b16 %v2203, %v2201
      %v2264 = vpack.c.b16 %v2204, %v2202
      %v2265 = vpack.c.b16 %v2207, %v2205
      %v2266 = vpack.c.b16 %v2208, %v2206
      %v2267 = vpack.c.b16 %v2211, %v2209
      %v2268 = vpack.c.b16 %v2212, %v2210
      %v2269 = vpack.c.b16 %v2215, %v2213
      %v2270 = vpack.c.b16 %v2216, %v2214
      %v2271 = vpack.c.b16 %v2219, %v2217
      %v2272 = vpack.c.b16 %v2220, %v2218
      %v2273 = vpack.c.b16 %v2223, %v2221
      %v2274 = vpack.c.b16 %v2224, %v2222
      %v2275 = vpack.c.b16 %v2227, %v2225
      %v2276 = vpack.c.b16 %v2228, %v2226
      %v2277 = vpack.c.b16 %v2231, %v2229
      %v2278 = vpack.c.b16 %v2232, %v2230
      %v2279 = vpack.c.b16 %v2235, %v2233
      %v2280 = vpack.c.b16 %v2236, %v2234
      %v2281 = vpack.c.b16 %v2239, %v2237
      %v2282 = vpack.c.b16 %v2240, %v2238
      %v2283 = vpack.c.b16 %v2243, %v2241
      %v2284 = vpack.c.b16 %v2244, %v2242
      %v2285 = vpack.c.b16 %v2247, %v2245
      %v2286 = vpack.c.b16 %v2248, %v2246
      %v2287 = vpack.c.b16 %v2251, %v2249
      %v2288 = vpack.c.b16 %v2252, %v2250
      %v2289 = vpack.c.b16 %v2255, %v2253
      %v2290 = vpack.c.b16 %v2256, %v2254
      %v2291 = vpack.c.b16 %v2259, %v2257
      %v2292 = vpack.c.b16 %v2260, %v2258
      %2325 = vmatpush.bf16.msra.mxu0 %v2275
      %2326 = vmatpush.bf16.msra.mxu0 %v2273
      %2327 = vmatpush.bf16.msra.mxu0 %v2271
      %2328 = vmatpush.bf16.msra.mxu0 %v2269
      %2329 = vmatpush.bf16.msra.mxu0 %v2267
      %2330 = vmatpush.bf16.msra.mxu0 %v2265
      %2331 = vmatpush.bf16.msra.mxu0 %v2263
      %2332 = vmatpush.bf16.msra.mxu0 %v2261
      %2333 = vmatmul.bf16.gmra.mxu0 %v2125
      %v2334 = vpop.f32.mrf.mxu0
      %v2335 = vadd.f32 %v1425, %v2334
      %v2336 = vpop.f32.mrf.mxu0
      %v2337 = vadd.f32 %v1431, %v2336
      %2338 = vmatmul.bf16.gmra.mxu0 %v2127
      %v2339 = vpop.f32.mrf.mxu0
      %v2340 = vadd.f32 %v1437, %v2339
      %v2341 = vpop.f32.mrf.mxu0
      %v2342 = vadd.f32 %v1443, %v2341
      %2343 = vmatmul.bf16.gmra.mxu0 %v2129
      %v2344 = vpop.f32.mrf.mxu0
      %v2345 = vadd.f32 %v1449, %v2344
      %v2346 = vpop.f32.mrf.mxu0
      %v2347 = vadd.f32 %v1455, %v2346
      %2348 = vmatmul.bf16.gmra.mxu0 %v2131
      %v2349 = vpop.f32.mrf.mxu0
      %v2350 = vadd.f32 %v1461, %v2349
      %v2351 = vpop.f32.mrf.mxu0
      %v2352 = vadd.f32 %v1467, %v2351
      %2353 = vdwg.mxu0
      %2354 = vmatpush.bf16.msra.mxu0 %v2291
      %2355 = vmatpush.bf16.msra.mxu0 %v2289
      %2356 = vmatpush.bf16.msra.mxu0 %v2287
      %2357 = vmatpush.bf16.msra.mxu0 %v2285
      %2358 = vmatpush.bf16.msra.mxu0 %v2283
      %2359 = vmatpush.bf16.msra.mxu0 %v2281
      %2360 = vmatpush.bf16.msra.mxu0 %v2279
      %2361 = vmatpush.bf16.msra.mxu0 %v2277
      %2362 = vmatmul.bf16.gmra.mxu0 %v2126
      %v2363 = vpop.f32.mrf.mxu0
      %v2364 = vadd.f32 %v2335, %v2363
      %v2365 = vpop.f32.mrf.mxu0
      %v2366 = vadd.f32 %v2337, %v2365
      %2367 = vmatmul.bf16.gmra.mxu0 %v2128
      %v2368 = vpop.f32.mrf.mxu0
      %v2369 = vadd.f32 %v2340, %v2368
      %v2370 = vpop.f32.mrf.mxu0
      %v2371 = vadd.f32 %v2342, %v2370
      %2372 = vmatmul.bf16.gmra.mxu0 %v2130
      %v2373 = vpop.f32.mrf.mxu0
      %v2374 = vadd.f32 %v2345, %v2373
      %v2375 = vpop.f32.mrf.mxu0
      %v2376 = vadd.f32 %v2347, %v2375
      %2377 = vmatmul.bf16.gmra.mxu0 %v2132
      %v2378 = vpop.f32.mrf.mxu0
      %v2379 = vadd.f32 %v2350, %v2378
      %v2380 = vpop.f32.mrf.mxu0
      %v2381 = vadd.f32 %v2352, %v2380
      %2382 = vdwg.mxu0
      %2383 = vmatpush.bf16.msra.mxu0 %v2276
      %2384 = vmatpush.bf16.msra.mxu0 %v2274
      %2385 = vmatpush.bf16.msra.mxu0 %v2272
      %2386 = vmatpush.bf16.msra.mxu0 %v2270
      %2387 = vmatpush.bf16.msra.mxu0 %v2268
      %2388 = vmatpush.bf16.msra.mxu0 %v2266
      %2389 = vmatpush.bf16.msra.mxu0 %v2264
      %2390 = vmatpush.bf16.msra.mxu0 %v2262
      %2391 = vmatmul.bf16.gmra.mxu0 %v2125
      %v2392 = vpop.f32.mrf.mxu0
      %v2393 = vadd.f32 %v1426, %v2392
      %v2394 = vpop.f32.mrf.mxu0
      %v2395 = vadd.f32 %v1432, %v2394
      %2396 = vmatmul.bf16.gmra.mxu0 %v2127
      %v2397 = vpop.f32.mrf.mxu0
      %v2398 = vadd.f32 %v1438, %v2397
      %v2399 = vpop.f32.mrf.mxu0
      %v2400 = vadd.f32 %v1444, %v2399
      %2401 = vmatmul.bf16.gmra.mxu0 %v2129
      %v2402 = vpop.f32.mrf.mxu0
      %v2403 = vadd.f32 %v1450, %v2402
      %v2404 = vpop.f32.mrf.mxu0
      %v2405 = vadd.f32 %v1456, %v2404
      %2406 = vmatmul.bf16.gmra.mxu0 %v2131
      %v2407 = vpop.f32.mrf.mxu0
      %v2408 = vadd.f32 %v1462, %v2407
      %v2409 = vpop.f32.mrf.mxu0
      %v2410 = vadd.f32 %v1468, %v2409
      %2411 = vdwg.mxu0
      %2412 = vmatpush.bf16.msra.mxu0 %v2292
      %2413 = vmatpush.bf16.msra.mxu0 %v2290
      %2414 = vmatpush.bf16.msra.mxu0 %v2288
      %2415 = vmatpush.bf16.msra.mxu0 %v2286
      %2416 = vmatpush.bf16.msra.mxu0 %v2284
      %2417 = vmatpush.bf16.msra.mxu0 %v2282
      %2418 = vmatpush.bf16.msra.mxu0 %v2280
      %2419 = vmatpush.bf16.msra.mxu0 %v2278
      %2420 = vmatmul.bf16.gmra.mxu0 %v2126
      %v2421 = vpop.f32.mrf.mxu0
      %v2422 = vadd.f32 %v2393, %v2421
      %v2423 = vpop.f32.mrf.mxu0
      %v2424 = vadd.f32 %v2395, %v2423
      %2425 = vmatmul.bf16.gmra.mxu0 %v2128
      %v2426 = vpop.f32.mrf.mxu0
      %v2427 = vadd.f32 %v2398, %v2426
      %v2428 = vpop.f32.mrf.mxu0
      %v2429 = vadd.f32 %v2400, %v2428
      %2430 = vmatmul.bf16.gmra.mxu0 %v2130
      %v2431 = vpop.f32.mrf.mxu0
      %v2432 = vadd.f32 %v2403, %v2431
      %v2433 = vpop.f32.mrf.mxu0
      %v2434 = vadd.f32 %v2405, %v2433
      %2435 = vmatmul.bf16.gmra.mxu0 %v2132
      %v2436 = vpop.f32.mrf.mxu0
      %v2437 = vadd.f32 %v2408, %v2436
      %v2438 = vpop.f32.mrf.mxu0
      %v2439 = vadd.f32 %v2410, %v2438
      %2440 = vdwg.mxu0
      %v2441 = vtanh.pop %v2364
      %v2442 = vtanh.pop %v2422
      %v2443 = vtanh.pop %v2366
      %v2444 = vtanh.pop %v2424
      %v2445 = vtanh.pop %v2369
      %v2446 = vtanh.pop %v2427
      %v2447 = vtanh.pop %v2371
      %v2448 = vtanh.pop %v2429
      %v2449 = vtanh.pop %v2374
      %v2450 = vtanh.pop %v2432
      %v2451 = vtanh.pop %v2376
      %v2452 = vtanh.pop %v2434
      %v2453 = vtanh.pop %v2379
      %v2454 = vtanh.pop %v2437
      %v2455 = vtanh.pop %v2381
      %v2456 = vtanh.pop %v2439
      %v2457 = vsub.f32 1.0, %v1563
      %v2458 = vsub.f32 1.0, %v1578
      %v2459 = vsub.f32 1.0, %v1593
      %v2460 = vsub.f32 1.0, %v1608
      %v2461 = vsub.f32 1.0, %v1623
      %v2462 = vsub.f32 1.0, %v1638
      %v2463 = vsub.f32 1.0, %v1653
      %v2464 = vsub.f32 1.0, %v1668
      %v2465 = vsub.f32 1.0, %v1683
      %v2466 = vsub.f32 1.0, %v1698
      %v2467 = vsub.f32 1.0, %v1713
      %v2468 = vsub.f32 1.0, %v1728
      %v2469 = vsub.f32 1.0, %v1743
      %v2470 = vsub.f32 1.0, %v1758
      %v2471 = vsub.f32 1.0, %v1773
      %v2472 = vsub.f32 1.0, %v1788
      %v2473 = vmul.f32 %v2457, %v757
      %v2474 = vmul.f32 %v2458, %v758
      %v2475 = vmul.f32 %v2459, %v759
      %v2476 = vmul.f32 %v2460, %v760
      %v2477 = vmul.f32 %v2461, %v761
      %v2478 = vmul.f32 %v2462, %v762
      %v2479 = vmul.f32 %v2463, %v763
      %v2480 = vmul.f32 %v2464, %v764
      %v2481 = vmul.f32 %v2465, %v765
      %v2482 = vmul.f32 %v2466, %v766
      %v2483 = vmul.f32 %v2467, %v767
      %v2484 = vmul.f32 %v2468, %v768
      %v2485 = vmul.f32 %v2469, %v769
      %v2486 = vmul.f32 %v2470, %v770
      %v2487 = vmul.f32 %v2471, %v771
      %v2488 = vmul.f32 %v2472, %v772
      %v2489 = vmul.f32 %v1563, %v2441
      %v2490 = vmul.f32 %v1578, %v2442
      %v2491 = vmul.f32 %v1593, %v2443
      %v2492 = vmul.f32 %v1608, %v2444
      %v2493 = vmul.f32 %v1623, %v2445
      %v2494 = vmul.f32 %v1638, %v2446
      %v2495 = vmul.f32 %v1653, %v2447
      %v2496 = vmul.f32 %v1668, %v2448
      %v2497 = vmul.f32 %v1683, %v2449
      %v2498 = vmul.f32 %v1698, %v2450
      %v2499 = vmul.f32 %v1713, %v2451
      %v2500 = vmul.f32 %v1728, %v2452
      %v2501 = vmul.f32 %v1743, %v2453
      %v2502 = vmul.f32 %v1758, %v2454
      %v2503 = vmul.f32 %v1773, %v2455
      %v2504 = vmul.f32 %v1788, %v2456
      %v2505 = vadd.f32 %v2473, %v2489
      %v2506 = vadd.f32 %v2474, %v2490
      %v2507 = vadd.f32 %v2475, %v2491
      %v2508 = vadd.f32 %v2476, %v2492
      %v2509 = vadd.f32 %v2477, %v2493
      %v2510 = vadd.f32 %v2478, %v2494
      %v2511 = vadd.f32 %v2479, %v2495
      %v2512 = vadd.f32 %v2480, %v2496
      %v2513 = vadd.f32 %v2481, %v2497
      %v2514 = vadd.f32 %v2482, %v2498
      %v2515 = vadd.f32 %v2483, %v2499
      %v2516 = vadd.f32 %v2484, %v2500
      %v2517 = vadd.f32 %v2485, %v2501
      %v2518 = vadd.f32 %v2486, %v2502
      %v2519 = vadd.f32 %v2487, %v2503
      %v2520 = vadd.f32 %v2488, %v2504
      %2521 = vst [vmem:[#allocation2] sm:$0xff] %v2505
      %2522 = vst [vmem:[#allocation2 + $0x8] sm:$0xff] %v2506
      %2523 = vst [vmem:[#allocation2 + $0x10] sm:$0xff] %v2507
      %2524 = vst [vmem:[#allocation2 + $0x18] sm:$0xff] %v2508
      %2525 = vst [vmem:[#allocation2 + $0x20] sm:$0xff] %v2509
      %2526 = vst [vmem:[#allocation2 + $0x28] sm:$0xff] %v2510
      %2527 = vst [vmem:[#allocation2 + $0x30] sm:$0xff] %v2511
      %2528 = vst [vmem:[#allocation2 + $0x38] sm:$0xff] %v2512
      %2529 = vst [vmem:[#allocation2 + $0x40] sm:$0xff] %v2513
      %2530 = vst [vmem:[#allocation2 + $0x48] sm:$0xff] %v2514
      %2531 = vst [vmem:[#allocation2 + $0x50] sm:$0xff] %v2515
      %2532 = vst [vmem:[#allocation2 + $0x58] sm:$0xff] %v2516
      %2533 = vst [vmem:[#allocation2 + $0x60] sm:$0xff] %v2517
      %2534 = vst [vmem:[#allocation2 + $0x68] sm:$0xff] %v2518
      %2535 = vst [vmem:[#allocation2 + $0x70] sm:$0xff] %v2519
      %2536 = vst [vmem:[#allocation2 + $0x78] sm:$0xff] %v2520
      %v2537 = vpack.c.bf16 %v2507, %v2505
      %v2538 = vpack.c.bf16 %v2508, %v2506
      %v2539 = vpack.c.bf16 %v2511, %v2509
      %v2540 = vpack.c.bf16 %v2512, %v2510
      %v2541 = vpack.c.bf16 %v2515, %v2513
      %v2542 = vpack.c.bf16 %v2516, %v2514
      %v2543 = vpack.c.bf16 %v2519, %v2517
      %v2544 = vpack.c.bf16 %v2520, %v2518
      %v2545 = vld [vmem:[%s6] sm:$0xf]
      %v2546 = vld [vmem:[%s6 + $0x4] sm:$0xf]
      %v2547 = vld [vmem:[%s6 + $0x8] sm:$0xf]
      %v2548 = vld [vmem:[%s6 + $0xc] sm:$0xf]
      %v2549 = vld [vmem:[%s6 + $0x10] sm:$0xf]
      %v2550 = vld [vmem:[%s6 + $0x14] sm:$0xf]
      %v2551 = vld [vmem:[%s6 + $0x18] sm:$0xf]
      %v2552 = vld [vmem:[%s6 + $0x1c] sm:$0xf]
      %v2553 = vld [vmem:[%s6 + $0x20] sm:$0xf]
      %v2554 = vld [vmem:[%s6 + $0x24] sm:$0xf]
      %v2555 = vld [vmem:[%s6 + $0x28] sm:$0xf]
      %v2556 = vld [vmem:[%s6 + $0x2c] sm:$0xf]
      %v2557 = vld [vmem:[%s6 + $0x30] sm:$0xf]
      %v2558 = vld [vmem:[%s6 + $0x34] sm:$0xf]
      %v2559 = vld [vmem:[%s6 + $0x38] sm:$0xf]
      %v2560 = vld [vmem:[%s6 + $0x3c] sm:$0xf]
      %v2561 = vld [vmem:[%s6 + $0x40] sm:$0xf]
      %v2562 = vld [vmem:[%s6 + $0x44] sm:$0xf]
      %v2563 = vld [vmem:[%s6 + $0x48] sm:$0xf]
      %v2564 = vld [vmem:[%s6 + $0x4c] sm:$0xf]
      %v2565 = vld [vmem:[%s6 + $0x50] sm:$0xf]
      %v2566 = vld [vmem:[%s6 + $0x54] sm:$0xf]
      %v2567 = vld [vmem:[%s6 + $0x58] sm:$0xf]
      %v2568 = vld [vmem:[%s6 + $0x5c] sm:$0xf]
      %v2569 = vld [vmem:[%s6 + $0x60] sm:$0xf]
      %v2570 = vld [vmem:[%s6 + $0x64] sm:$0xf]
      %v2571 = vld [vmem:[%s6 + $0x68] sm:$0xf]
      %v2572 = vld [vmem:[%s6 + $0x6c] sm:$0xf]
      %v2573 = vld [vmem:[%s6 + $0x70] sm:$0xf]
      %v2574 = vld [vmem:[%s6 + $0x74] sm:$0xf]
      %v2575 = vld [vmem:[%s6 + $0x78] sm:$0xf]
      %v2576 = vld [vmem:[%s6 + $0x7c] sm:$0xf]
      %v2577 = vld [vmem:[%s7] sm:$0x1]
      %v2579 = vperm.slane %v2577, 0
      %v2613 = vunpack.c.l.b16 %v2545
      %v2614 = vunpack.c.l.b16 %v2546
      %v2615 = vunpack.c.l.b16 %v2547
      %v2616 = vunpack.c.l.b16 %v2548
      %v2617 = vunpack.c.l.b16 %v2549
      %v2618 = vunpack.c.l.b16 %v2550
      %v2619 = vunpack.c.l.b16 %v2551
      %v2620 = vunpack.c.l.b16 %v2552
      %v2621 = vunpack.c.l.b16 %v2553
      %v2622 = vunpack.c.l.b16 %v2554
      %v2623 = vunpack.c.l.b16 %v2555
      %v2624 = vunpack.c.l.b16 %v2556
      %v2625 = vunpack.c.l.b16 %v2557
      %v2626 = vunpack.c.l.b16 %v2558
      %v2627 = vunpack.c.l.b16 %v2559
      %v2628 = vunpack.c.l.b16 %v2560
      %v2629 = vunpack.c.l.b16 %v2561
      %v2630 = vunpack.c.l.b16 %v2562
      %v2631 = vunpack.c.l.b16 %v2563
      %v2632 = vunpack.c.l.b16 %v2564
      %v2633 = vunpack.c.l.b16 %v2565
      %v2634 = vunpack.c.l.b16 %v2566
      %v2635 = vunpack.c.l.b16 %v2567
      %v2636 = vunpack.c.l.b16 %v2568
      %v2637 = vunpack.c.l.b16 %v2569
      %v2638 = vunpack.c.l.b16 %v2570
      %v2639 = vunpack.c.l.b16 %v2571
      %v2640 = vunpack.c.l.b16 %v2572
      %v2641 = vunpack.c.l.b16 %v2573
      %v2642 = vunpack.c.l.b16 %v2574
      %v2643 = vunpack.c.l.b16 %v2575
      %v2644 = vunpack.c.l.b16 %v2576
      %v2645 = vpack.c.b16 %v2614, %v2613
      %v2646 = vpack.c.b16 %v2616, %v2615
      %v2647 = vpack.c.b16 %v2618, %v2617
      %v2648 = vpack.c.b16 %v2620, %v2619
      %v2649 = vpack.c.b16 %v2622, %v2621
      %v2650 = vpack.c.b16 %v2624, %v2623
      %v2651 = vpack.c.b16 %v2626, %v2625
      %v2652 = vpack.c.b16 %v2628, %v2627
      %v2653 = vpack.c.b16 %v2630, %v2629
      %v2654 = vpack.c.b16 %v2632, %v2631
      %v2655 = vpack.c.b16 %v2634, %v2633
      %v2656 = vpack.c.b16 %v2636, %v2635
      %v2657 = vpack.c.b16 %v2638, %v2637
      %v2658 = vpack.c.b16 %v2640, %v2639
      %v2659 = vpack.c.b16 %v2642, %v2641
      %v2660 = vpack.c.b16 %v2644, %v2643
      %2677 = vmatpush.bf16.msra.mxu0 %v2652
      %2678 = vmatpush.bf16.msra.mxu0 %v2651
      %2679 = vmatpush.bf16.msra.mxu0 %v2650
      %2680 = vmatpush.bf16.msra.mxu0 %v2649
      %2681 = vmatpush.bf16.msra.mxu0 %v2648
      %2682 = vmatpush.bf16.msra.mxu0 %v2647
      %2683 = vmatpush.bf16.msra.mxu0 %v2646
      %2684 = vmatpush.bf16.msra.mxu0 %v2645
      %2685 = vmatmul.bf16.gmra.mxu0 %v2537
      %v2686 = vpop.f32.mrf.mxu0
      %v2687 = vadd.f32 %v2579, %v2686
      %v2688 = vpop.f32.mrf.mxu0
      %v2689 = vadd.f32 %v2579, %v2688
      %2690 = vmatmul.bf16.gmra.mxu0 %v2539
      %v2691 = vpop.f32.mrf.mxu0
      %v2692 = vadd.f32 %v2579, %v2691
      %v2693 = vpop.f32.mrf.mxu0
      %v2694 = vadd.f32 %v2579, %v2693
      %2695 = vmatmul.bf16.gmra.mxu0 %v2541
      %v2696 = vpop.f32.mrf.mxu0
      %v2697 = vadd.f32 %v2579, %v2696
      %v2698 = vpop.f32.mrf.mxu0
      %v2699 = vadd.f32 %v2579, %v2698
      %2700 = vmatmul.bf16.gmra.mxu0 %v2543
      %v2701 = vpop.f32.mrf.mxu0
      %v2702 = vadd.f32 %v2579, %v2701
      %v2703 = vpop.f32.mrf.mxu0
      %v2704 = vadd.f32 %v2579, %v2703
      %2705 = vdwg.mxu0
      %2706 = vmatpush.bf16.msra.mxu0 %v2660
      %2707 = vmatpush.bf16.msra.mxu0 %v2659
      %2708 = vmatpush.bf16.msra.mxu0 %v2658
      %2709 = vmatpush.bf16.msra.mxu0 %v2657
      %2710 = vmatpush.bf16.msra.mxu0 %v2656
      %2711 = vmatpush.bf16.msra.mxu0 %v2655
      %2712 = vmatpush.bf16.msra.mxu0 %v2654
      %2713 = vmatpush.bf16.msra.mxu0 %v2653
      %2714 = vmatmul.bf16.gmra.mxu0 %v2538
      %v2715 = vpop.f32.mrf.mxu0
      %v2716 = vadd.f32 %v2687, %v2715
      %v2717 = vpop.f32.mrf.mxu0
      %v2718 = vadd.f32 %v2689, %v2717
      %2719 = vmatmul.bf16.gmra.mxu0 %v2540
      %v2720 = vpop.f32.mrf.mxu0
      %v2721 = vadd.f32 %v2692, %v2720
      %v2722 = vpop.f32.mrf.mxu0
      %v2723 = vadd.f32 %v2694, %v2722
      %2724 = vmatmul.bf16.gmra.mxu0 %v2542
      %v2725 = vpop.f32.mrf.mxu0
      %v2726 = vadd.f32 %v2697, %v2725
      %v2727 = vpop.f32.mrf.mxu0
      %v2728 = vadd.f32 %v2699, %v2727
      %2729 = vmatmul.bf16.gmra.mxu0 %v2544
      %v2730 = vpop.f32.mrf.mxu0
      %v2731 = vadd.f32 %v2702, %v2730
      %v2732 = vpop.f32.mrf.mxu0
      %v2733 = vadd.f32 %v2704, %v2732
      %2734 = vdwg.mxu0
      %v2735 = vpack.c.bf16 %v2716, %v2716
      %v2736 = vpack.c.bf16 %v2718, %v2718
      %v2737 = vpack.c.bf16 %v2721, %v2721
      %v2738 = vpack.c.bf16 %v2723, %v2723
      %v2739 = vpack.c.bf16 %v2726, %v2726
      %v2740 = vpack.c.bf16 %v2728, %v2728
      %v2741 = vpack.c.bf16 %v2731, %v2731
      %v2742 = vpack.c.bf16 %v2733, %v2733
      %2743 = vst [vmem:[%s357] sm:$0xf] %v2735
      %2744 = vst [vmem:[%s357 + $0x4] sm:$0xf] %v2736
      %2745 = vst [vmem:[%s357 + $0x8] sm:$0xf] %v2737
      %2746 = vst [vmem:[%s357 + $0xc] sm:$0xf] %v2738
      %2747 = vst [vmem:[%s357 + $0x10] sm:$0xf] %v2739
      %2748 = vst [vmem:[%s357 + $0x14] sm:$0xf] %v2740
      %2749 = vst [vmem:[%s357 + $0x18] sm:$0xf] %v2741
      %2750 = vst [vmem:[%s357 + $0x1c] sm:$0xf] %v2742
      %s2751 = smul.u32 8, %s23
      %p2752 = scmp.lt.s32.totalorder %s24, 3
      %s2753 = scalar_select %p2752, %s24, 3
      %p2754 = scmp.lt.s32.totalorder %s2751, 15
      %s2755 = scalar_select %p2754, %s2751, 15
      %s2756 = smul.addr %s2753, 16
      %s2757 = sadd.s32 %s2755, %s2756
      %s2758 = smul.addr %s2757, 4
      %s2759 = scalar_lea.vmem %s8, %s2758
      // Predicated region
      $region57: #{dgmr_forward.1} parent=51 // pred_check
        %p2760 = pneg %p229
      $region58: #{dgmr_forward.1} parent=51 // pred_check_branch
        %2762 = sbr.rel (%p2760) target = $region60
      $region59: #{dgmr_forward.1} parent=51 // pred_region
        %s2763 = smul.u32 8, %s23
      $region60: #{dgmr_forward.1} parent=51 // pred_fallthru
        _
    $region52: #{dgmr_forward.1} parent=5 // pred_fallthru
      _
    %p2764 = scmp.le.s32.totalorder 2, %s14
    // Predicated region
    $region61: #{dgmr_forward.1} parent=5 // pred_check
      %p2765 = pneg %p2764
    $region62: #{dgmr_forward.1} parent=5 // pred_check_branch
      %2767 = sbr.rel (%p2765) target = $region64
    $region63: #{dgmr_forward.1} parent=5 // pred_region
      %s2768 = ssub.s32 %s14, 2
      // Predicated region
      $region65: #{dgmr_forward.1} parent=63 // pred_check
        %p2769 = pneg %p235
      $region66: #{dgmr_forward.1} parent=63 // pred_check_branch
        %2771 = sbr.rel (%p2769) target = $region68
      $region67: #{dgmr_forward.1} parent=63 // pred_region
        %s2772 = smul.u32 8, %s25
        %p2773 = scmp.lt.s32.totalorder %s26, 3
        %s2774 = scalar_select %p2773, %s26, 3
        %p2775 = scmp.lt.s32.totalorder %s2772, 15
        %s2776 = scalar_select %p2775, %s2772, 15
        %s2777 = smul.addr %s2774, 16
        %s2778 = sadd.s32 %s2776, %s2777
        %s2779 = smul.addr %s2778, 4
        %s2780 = scalar_lea.vmem %s8, %s2779
      $region68: #{dgmr_forward.1} parent=63 // pred_fallthru
        _
    $region64: #{dgmr_forward.1} parent=5 // pred_fallthru
      _
  $region6: #{dgmr_forward.1} parent=0 // loop_footer
    %s18 = sadd.s32 1, %s14
  $region7: #{dgmr_forward.1} parent=0 // loop_footer_branch
    %13 = sbr.rel target = $region3
  $region8: #{dgmr_forward.1} parent=0 // loop_exit
    _

</llo_original>
